<compile_context>
chip_gen: v5e
topology: v5e:2x2
jax: 0.10.0
libtpu: 0.0.40
codegen_flags: <defaults>
</compile_context>

<pallas_src>
import numpy as np
import jax
import jax.numpy as jnp
from jax.experimental import pallas as pl
from jax.experimental.pallas import tpu as pltpu

# ----------------------------- config ---------------------------------------
ACTION_DIM = 6
NUM_LAYERS = 2
NUM_HEADS = 2
D_MODEL = 32
FFN_SIZE = 64
CONTEXT_SIZE = 16
BATCH = 2
SEQ = 8
OBS_DIM = 4

HEAD_DIM = D_MODEL // NUM_HEADS          # 16
HALF = HEAD_DIM // 2                     # 8
QKV_WIDTH = 128                          # padded fused q|k|v output width
OUT_WIDTH = 128                          # padded fused policy|value output
EPS_RMS = 1.1920929e-07                  # torch.finfo(torch.float32).eps
NEG_INF = -1e30

# weight-slab block indices (each block is 128 columns wide)
WB_ROPE, WB_ENC, WB_HEAD = 0, 1, 2
WB_LAYER0, WB_PER_LAYER = 3, 4           # qkv, wo, gu, wd per layer
NUM_W_BLOCKS = WB_LAYER0 + NUM_LAYERS * WB_PER_LAYER

# bias/norm vector-slab row indices (each row is one 128-wide padded vector)
VR_ENC_B, VR_OUT_NORM, VR_HEAD_B = 0, 1, 2
VR_LAYER0, VR_PER_LAYER = 3, 6           # attn_norm, b_qkv, bo, ffn_norm, b_gu, bd
NUM_V_ROWS = VR_LAYER0 + NUM_LAYERS * VR_PER_LAYER
VEC_SLAB_ROWS = ((NUM_V_ROWS + 7) // 8) * 8


# ----------------------------- in-kernel helpers -----------------------------
def _rmsnorm(x, scale_row):
    """RMSNorm over last dim.  x: [M, D] f32, scale_row: [1, D]."""
    ms = jnp.mean(x * x, axis=-1, keepdims=True)
    return x * jax.lax.rsqrt(ms + EPS_RMS) * scale_row


# ----------------------------- fused forward kernel --------------------------
def _fused_forward_kernel(obs_ref, c_ref, s_ref, w_ref, vec_ref, out_ref):
    D, F, T, B, H, Dh = D_MODEL, FFN_SIZE, SEQ, BATCH, NUM_HEADS, HEAD_DIM
    BH = B * H

    def w_blk(blk, rows, cols):
        c0 = blk * 128
        return w_ref[0:rows, c0:c0 + cols]

    def v_row(r, cols):
        return vec_ref[r:r + 1, 0:cols]

    cos_full = c_ref[...]                       # [M, 128]
    sin_full = s_ref[...]                       # [M, 128]
    rope_p = w_blk(WB_ROPE, 128, 128)           # signed rotate-half permutation

    # causal mask, built once per kernel
    row_idx = jax.lax.broadcasted_iota(jnp.int32, (BH, T, T), 1)
    col_idx = jax.lax.broadcasted_iota(jnp.int32, (BH, T, T), 2)
    causal = col_idx <= row_idx

    # observation encoder: [M, 4] @ [4, D] + b
    x = jnp.dot(obs_ref[...], w_blk(WB_ENC, OBS_DIM, D),
                preferred_element_type=jnp.float32) + v_row(VR_ENC_B, D)

    for l in range(NUM_LAYERS):                 # static unroll
        wb = WB_LAYER0 + l * WB_PER_LAYER
        vb = VR_LAYER0 + l * VR_PER_LAYER

        # --- attention block (pre-norm); fused+padded QKV; RoPE in one pass ---
        h = _rmsnorm(x, v_row(vb + 0, D))
        qkv = jnp.dot(h, w_blk(wb + 0, D, QKV_WIDTH),
                      preferred_element_type=jnp.float32) + v_row(vb + 1, QKV_WIDTH)
        # RoPE (sm_scale already folded into Q weights/bias):
        #   roped = qkv*cos + rotate_half(qkv)*sin  (v + pad columns pass through)
        qkv = qkv * cos_full + jnp.dot(qkv, rope_p,
                                       preferred_element_type=jnp.float32) * sin_full

        def heads_to_batch(off):
            # stack heads into the batch axis (head-major) -> [B*H, T, Dh]
            return jnp.concatenate(
                [qkv[:, off + hh * Dh: off + (hh + 1) * Dh].reshape(B, T, Dh)
                 for hh in range(H)], axis=0)

        q_b = heads_to_batch(0)
        k_b = heads_to_batch(D)
        v_b = heads_to_batch(2 * D)

        sc = jnp.einsum('bqd,bkd->bqk', q_b, k_b,
                        preferred_element_type=jnp.float32)      # [BH, T, T]
        sc = jnp.where(causal, sc, NEG_INF)
        m = jnp.max(sc, axis=-1, keepdims=True)
        p = jnp.exp(sc - m)
        p = p / jnp.sum(p, axis=-1, keepdims=True)                # exact softmax
        o_b = jnp.einsum('bqk,bkd->bqd', p, v_b,
                         preferred_element_type=jnp.float32)      # [BH, T, Dh]
        attn = jnp.concatenate(
            [o_b[hh * B:(hh + 1) * B].reshape(B * T, Dh) for hh in range(H)],
            axis=-1)                                              # [M, D]

        x = x + jnp.dot(attn, w_blk(wb + 1, D, D),
                        preferred_element_type=jnp.float32) + v_row(vb + 2, D)

        # --- GLU FFN block (pre-norm), fused gate/up projection (2F = 128) ---
        h2 = _rmsnorm(x, v_row(vb + 3, D))
        gu = jnp.dot(h2, w_blk(wb + 2, D, 2 * F),
                     preferred_element_type=jnp.float32) + v_row(vb + 4, 2 * F)
        g = gu[:, :F]
        u = gu[:, F:]
        f = (g * jax.lax.logistic(g)) * u        # SiLU(g) * u
        x = x + jnp.dot(f, w_blk(wb + 3, F, D),
                        preferred_element_type=jnp.float32) + v_row(vb + 5, D)

    # --- output norm + fused (pre-scaled, padded) policy/value heads ---
    xf = _rmsnorm(x, v_row(VR_OUT_NORM, D))
    out_ref[...] = (jnp.dot(xf, w_blk(WB_HEAD, D, OUT_WIDTH),
                            preferred_element_type=jnp.float32)
                    + v_row(VR_HEAD_B, OUT_WIDTH)).astype(out_ref.dtype)


# ----------------------------- wrapper ---------------------------------------
def forward(fused, inputs, positions):
    """inputs: [B, T, 4] f32, positions: [B, T] int32.
    Returns (policy_logits [B, T, A], value [B, T])."""
    B, T, _ = inputs.shape
    assert B == BATCH and T == SEQ
    M = B * T
    obs = inputs.reshape(M, OBS_DIM)

    # RoPE cos/sin tables expanded to the padded QKV layout (tiny XLA op).
    inv_freq = 1.0 / (10000.0 ** (jnp.arange(HALF, dtype=jnp.float32) / HALF))
    ang = positions.astype(jnp.float32).reshape(M, 1) * inv_freq[None, :]
    cos = jnp.cos(ang)                                     # [M, HALF]
    sin = jnp.sin(ang)
    cos_head = jnp.concatenate([cos, cos], axis=-1)        # [M, HEAD_DIM]
    sin_head = jnp.concatenate([sin, sin], axis=-1)
    pad_w = QKV_WIDTH - 2 * D_MODEL
    cos_full = jnp.concatenate(
        [jnp.tile(cos_head, (1, 2 * NUM_HEADS)),
         jnp.ones((M, pad_w), jnp.float32)], axis=-1)      # [M, 128]
    sin_full = jnp.concatenate(
        [jnp.tile(sin_head, (1, 2 * NUM_HEADS)),
         jnp.zeros((M, pad_w), jnp.float32)], axis=-1)     # [M, 128]

    operands = (obs, cos_full, sin_full, fused["w_slab"], fused["vec_slab"])

    out = pl.pallas_call(
        _fused_forward_kernel,
        out_shape=jax.ShapeDtypeStruct((M, OUT_WIDTH), jnp.float32),
        in_specs=[pl.BlockSpec(memory_space=pltpu.MemorySpace.VMEM)
                  for _ in operands],
        out_specs=pl.BlockSpec(memory_space=pltpu.MemorySpace.VMEM),
    )(*operands)

    logits = out[:, :ACTION_DIM].reshape(B, T, ACTION_DIM)
    value = out[:, ACTION_DIM].reshape(B, T)
    return logits, value


# ----------------------------- params ----------------------------------------
def _lin_init(key, fan_in, fan_out):
    kw, kb = jax.random.split(key)
    bound = 1.0 / (fan_in ** 0.5)
    w = jax.random.uniform(kw, (fan_in, fan_out), jnp.float32, -bound, bound)
    b = jax.random.uniform(kb, (fan_out,), jnp.float32, -bound, bound)
    return w, b


def init_params(key):
    """Parameters mirroring the PyTorch module structure (weights as [in, out])."""
    keys = jax.random.split(key, 4 + NUM_LAYERS)
    params = {}
    params["enc_w"], params["enc_b"] = _lin_init(keys[0], OBS_DIM, D_MODEL)
    params["pol_w"], params["pol_b"] = _lin_init(keys[1], D_MODEL, ACTION_DIM)
    params["val_w"], params["val_b"] = _lin_init(keys[2], D_MODEL, 1)
    params["out_norm"] = jnp.ones((D_MODEL,), jnp.float32)

    layers = []
    for li in range(NUM_LAYERS):
        lk = jax.random.split(keys[4 + li], 8)
        lp = {}
        lp["attn_norm"] = jnp.ones((D_MODEL,), jnp.float32)
        lp["ffn_norm"] = jnp.ones((D_MODEL,), jnp.float32)
        lp["wq"], lp["bq"] = _lin_init(lk[0], D_MODEL, D_MODEL)
        lp["wk"], lp["bk"] = _lin_init(lk[1], D_MODEL, D_MODEL)
        lp["wv"], lp["bv"] = _lin_init(lk[2], D_MODEL, D_MODEL)
        lp["wo"], lp["bo"] = _lin_init(lk[3], D_MODEL, D_MODEL)
        lp["wg"], lp["bg"] = _lin_init(lk[4], D_MODEL, FFN_SIZE)
        lp["wu"], lp["bu"] = _lin_init(lk[5], D_MODEL, FFN_SIZE)
        lp["wd"], lp["bd"] = _lin_init(lk[6], FFN_SIZE, D_MODEL)
        layers.append(lp)
    params["layers"] = layers
    return params


def fuse_params(params):
    """One-time packing: all matmul weights into one [128, 11*128] slab
    (128-aligned column blocks, zero row/col padding), all biases/norm scales
    into one [16, 128] row slab.  Folds sm_scale into Q and 1/100 into the
    policy head."""
    D, F, Dh, H = D_MODEL, FFN_SIZE, HEAD_DIM, NUM_HEADS
    sm = 1.0 / float(Dh) ** 0.5
    layers = params["layers"]

    def np_(x):
        return np.asarray(x, np.float32)

    blocks = []

    # block 0: signed rotate-half permutation acting on the padded QKV row.
    P = np.zeros((128, 128), np.float32)
    for t in range(2):                       # q region, k region
        for hh in range(H):
            base = t * D + hh * Dh
            for i in range(HALF):
                P[base + HALF + i, base + i] = -1.0   # first half gets -x2*sin
                P[base + i, base + HALF + i] = 1.0    # second half gets +x1*sin
    blocks.append(P)

    # block 1: observation encoder [4, 32]
    enc = np.zeros((128, 128), np.float32)
    enc[:OBS_DIM, :D] = np_(params["enc_w"])
    blocks.append(enc)

    # block 2: fused policy (/100 folded) + value head, padded to 128 cols
    head = np.zeros((128, 128), np.float32)
    head[:D, :ACTION_DIM] = np_(params["pol_w"]) * 0.01
    head[:D, ACTION_DIM:ACTION_DIM + 1] = np_(params["val_w"])
    blocks.append(head)

    for lp in layers:
        qkv = np.zeros((128, 128), np.float32)
        qkv[:D, 0:D] = np_(lp["wq"]) * sm            # sm_scale folded into Q
        qkv[:D, D:2 * D] = np_(lp["wk"])
        qkv[:D, 2 * D:3 * D] = np_(lp["wv"])
        blocks.append(qkv)

        wo = np.zeros((128, 128), np.float32)
        wo[:D, :D] = np_(lp["wo"])
        blocks.append(wo)

        gu = np.zeros((128, 128), np.float32)
        gu[:D, :F] = np_(lp["wg"])
        gu[:D, F:2 * F] = np_(lp["wu"])
        blocks.append(gu)

        wd = np.zeros((128, 128), np.float32)
        wd[:F, :D] = np_(lp["wd"])
        blocks.append(wd)

    w_slab = np.concatenate(blocks, axis=1)          # [128, NUM_W_BLOCKS*128]
    assert w_slab.shape == (128, NUM_W_BLOCKS * 128)

    vec = np.zeros((VEC_SLAB_ROWS, 128), np.float32)
    vec[VR_ENC_B, :D] = np_(params["enc_b"])
    vec[VR_OUT_NORM, :D] = np_(params["out_norm"])
    vec[VR_HEAD_B, :ACTION_DIM] = np_(params["pol_b"]) * 0.01
    vec[VR_HEAD_B, ACTION_DIM] = float(np_(params["val_b"])[0])
    for l, lp in enumerate(layers):
        r = VR_LAYER0 + l * VR_PER_LAYER
        vec[r + 0, :D] = np_(lp["attn_norm"])
        vec[r + 1, 0:D] = np_(lp["bq"]) * sm
        vec[r + 1, D:2 * D] = np_(lp["bk"])
        vec[r + 1, 2 * D:3 * D] = np_(lp["bv"])
        vec[r + 2, :D] = np_(lp["bo"])
        vec[r + 3, :D] = np_(lp["ffn_norm"])
        vec[r + 4, :F] = np_(lp["bg"])
        vec[r + 4, F:2 * F] = np_(lp["bu"])
        vec[r + 5, :D] = np_(lp["bd"])

    return {"w_slab": jnp.asarray(w_slab), "vec_slab": jnp.asarray(vec)}


# ----------------------------- main -------------------------------------------
if __name__ == "__main__":
    key = jax.random.PRNGKey(0)
    k_in, k_par = jax.random.split(key)

    params = init_params(k_par)
    fused = fuse_params(params)

    inputs = jax.random.normal(k_in, (BATCH, SEQ, OBS_DIM), jnp.float32)
    positions = jnp.broadcast_to(jnp.arange(SEQ, dtype=jnp.int32), (BATCH, SEQ))

    logits, value = jax.jit(forward)(fused, inputs, positions)
    jax.block_until_ready((logits, value))

    assert logits.shape == (BATCH, SEQ, ACTION_DIM)
    assert value.shape == (BATCH, SEQ)
    assert bool(jnp.all(jnp.isfinite(logits))) and bool(jnp.all(jnp.isfinite(value)))
    print("KERNEL_OK")
</pallas_src>

<mosaic_0001>
module attributes {stable_mosaic.version = 11 : i64} {
  func.func @_fused_forward_kernel(%arg0: memref<16x4xf32, #tpu.memory_space<vmem>>, %arg1: memref<16x128xf32, #tpu.memory_space<vmem>>, %arg2: memref<16x128xf32, #tpu.memory_space<vmem>>, %arg3: memref<128x1408xf32, #tpu.memory_space<vmem>>, %arg4: memref<16x128xf32, #tpu.memory_space<vmem>>, %arg5: memref<16x128xf32, #tpu.memory_space<vmem>>) attributes {dimension_semantics = [], scalar_prefetch = 0 : i64, scratch_operands = 0 : i64, tpu.core_type = #tpu.core_type<tc>} {
    %c0 = arith.constant 0 : index
    %c0_0 = arith.constant 0 : index
    %0 = vector.load %arg1[%c0, %c0_0] : memref<16x128xf32, #tpu.memory_space<vmem>>, vector<16x128xf32>
    %c0_1 = arith.constant 0 : index
    %c0_2 = arith.constant 0 : index
    %1 = vector.load %arg2[%c0_1, %c0_2] : memref<16x128xf32, #tpu.memory_space<vmem>>, vector<16x128xf32>
    %c0_3 = arith.constant 0 : index
    %c0_4 = arith.constant 0 : index
    %2 = vector.load %arg3[%c0_3, %c0_4] : memref<128x1408xf32, #tpu.memory_space<vmem>>, vector<128x128xf32>
    %3 = tpu.iota {dimensions = array<i32: 1>} : vector<4x8x8xi32>
    %4 = tpu.iota {dimensions = array<i32: 2>} : vector<4x8x8xi32>
    %5 = arith.cmpi sle, %4, %3 : vector<4x8x8xi32>
    %c0_5 = arith.constant 0 : index
    %c0_6 = arith.constant 0 : index
    %6 = vector.load %arg0[%c0_5, %c0_6] : memref<16x4xf32, #tpu.memory_space<vmem>>, vector<16x4xf32>
    %c0_7 = arith.constant 0 : index
    %c128 = arith.constant 128 : index
    %7 = vector.load %arg3[%c0_7, %c128] : memref<128x1408xf32, #tpu.memory_space<vmem>>, vector<4x32xf32>
    %cst = arith.constant dense<0.000000e+00> : vector<16x32xf32>
    %8 = tpu.matmul %6, %7, %cst {dimension_numbers = #tpu.dot_dimension_numbers<[1], [0], [0], [1], [0, 0, 1, 1], [], []>} : vector<16x4xf32>, vector<4x32xf32>, vector<16x32xf32> -> vector<16x32xf32>
    %c0_8 = arith.constant 0 : index
    %c0_9 = arith.constant 0 : index
    %9 = vector.load %arg4[%c0_8, %c0_9] : memref<16x128xf32, #tpu.memory_space<vmem>>, vector<1x32xf32>
    %10 = vector.broadcast %9 : vector<1x32xf32> to vector<16x32xf32>
    %11 = arith.addf %8, %10 : vector<16x32xf32>
    %c3 = arith.constant 3 : index
    %c0_10 = arith.constant 0 : index
    %12 = vector.load %arg4[%c3, %c0_10] : memref<16x128xf32, #tpu.memory_space<vmem>>, vector<1x32xf32>
    %13 = arith.mulf %11, %11 : vector<16x32xf32>
    %cst_11 = arith.constant dense<0.000000e+00> : vector<16xf32>
    %14 = vector.multi_reduction <add>, %13, %cst_11 [1] : vector<16x32xf32> to vector<16xf32>
    %15 = vector.shape_cast %14 : vector<16xf32> to vector<16x1xf32>
    %cst_12 = arith.constant 3.200000e+01 : f32
    %16 = vector.broadcast %cst_12 : f32 to vector<16x1xf32>
    %17 = arith.divf %15, %16 : vector<16x1xf32>
    %cst_13 = arith.constant 1.1920929E-7 : f32
    %18 = vector.broadcast %cst_13 : f32 to vector<16x1xf32>
    %19 = arith.addf %17, %18 : vector<16x1xf32>
    %20 = math.rsqrt %19 : vector<16x1xf32>
    %21 = vector.broadcast %20 : vector<16x1xf32> to vector<16x32xf32>
    %22 = arith.mulf %11, %21 : vector<16x32xf32>
    %23 = vector.broadcast %12 : vector<1x32xf32> to vector<16x32xf32>
    %24 = arith.mulf %22, %23 : vector<16x32xf32>
    %c0_14 = arith.constant 0 : index
    %c384 = arith.constant 384 : index
    %25 = vector.load %arg3[%c0_14, %c384] : memref<128x1408xf32, #tpu.memory_space<vmem>>, vector<32x128xf32>
    %cst_15 = arith.constant dense<0.000000e+00> : vector<16x128xf32>
    %26 = tpu.matmul %24, %25, %cst_15 {dimension_numbers = #tpu.dot_dimension_numbers<[1], [0], [0], [1], [0, 0, 1, 1], [], []>} : vector<16x32xf32>, vector<32x128xf32>, vector<16x128xf32> -> vector<16x128xf32>
    %c4 = arith.constant 4 : index
    %c0_16 = arith.constant 0 : index
    %27 = vector.load %arg4[%c4, %c0_16] : memref<16x128xf32, #tpu.memory_space<vmem>>, vector<1x128xf32>
    %28 = vector.broadcast %27 : vector<1x128xf32> to vector<16x128xf32>
    %29 = arith.addf %26, %28 : vector<16x128xf32>
    %30 = arith.mulf %29, %0 : vector<16x128xf32>
    %cst_17 = arith.constant dense<0.000000e+00> : vector<16x128xf32>
    %31 = tpu.matmul %29, %2, %cst_17 {dimension_numbers = #tpu.dot_dimension_numbers<[1], [0], [0], [1], [0, 0, 1, 1], [], []>} : vector<16x128xf32>, vector<128x128xf32>, vector<16x128xf32> -> vector<16x128xf32>
    %32 = arith.mulf %31, %1 : vector<16x128xf32>
    %33 = arith.addf %30, %32 : vector<16x128xf32>
    %34 = vector.extract_strided_slice %33 {offsets = [0, 0], sizes = [16, 16], strides = [1, 1]} : vector<16x128xf32> to vector<16x16xf32>
    %35 = vector.shape_cast %34 : vector<16x16xf32> to vector<2x8x16xf32>
    %36 = vector.extract_strided_slice %33 {offsets = [0, 16], sizes = [16, 16], strides = [1, 1]} : vector<16x128xf32> to vector<16x16xf32>
    %37 = vector.shape_cast %36 : vector<16x16xf32> to vector<2x8x16xf32>
    %38 = tpu.concatenate %35, %37 in 0 : vector<2x8x16xf32>, vector<2x8x16xf32> -> vector<4x8x16xf32>
    %39 = vector.extract_strided_slice %33 {offsets = [0, 32], sizes = [16, 16], strides = [1, 1]} : vector<16x128xf32> to vector<16x16xf32>
    %40 = vector.shape_cast %39 : vector<16x16xf32> to vector<2x8x16xf32>
    %41 = vector.extract_strided_slice %33 {offsets = [0, 48], sizes = [16, 16], strides = [1, 1]} : vector<16x128xf32> to vector<16x16xf32>
    %42 = vector.shape_cast %41 : vector<16x16xf32> to vector<2x8x16xf32>
    %43 = tpu.concatenate %40, %42 in 0 : vector<2x8x16xf32>, vector<2x8x16xf32> -> vector<4x8x16xf32>
    %44 = vector.extract_strided_slice %33 {offsets = [0, 64], sizes = [16, 16], strides = [1, 1]} : vector<16x128xf32> to vector<16x16xf32>
    %45 = vector.shape_cast %44 : vector<16x16xf32> to vector<2x8x16xf32>
    %46 = vector.extract_strided_slice %33 {offsets = [0, 80], sizes = [16, 16], strides = [1, 1]} : vector<16x128xf32> to vector<16x16xf32>
    %47 = vector.shape_cast %46 : vector<16x16xf32> to vector<2x8x16xf32>
    %48 = tpu.concatenate %45, %47 in 0 : vector<2x8x16xf32>, vector<2x8x16xf32> -> vector<4x8x16xf32>
    "tpu.trace_start"() <{level = 10 : i32, message = "bqd,bkd->bqk"}> : () -> ()
    %cst_18 = arith.constant dense<0.000000e+00> : vector<4x8x8xf32>
    %49 = tpu.matmul %38, %43, %cst_18 {dimension_numbers = #tpu.dot_dimension_numbers<[2], [2], [1], [1], [0, 0, 0, 1, 1, 1], [0], [0]>} : vector<4x8x16xf32>, vector<4x8x16xf32>, vector<4x8x8xf32> -> vector<4x8x8xf32>
    %cst_19 = arith.constant -1.000000e+30 : f32
    "tpu.trace_stop"() : () -> ()
    %50 = vector.broadcast %cst_19 : f32 to vector<4x8x8xf32>
    %51 = arith.select %5, %49, %50 : vector<4x8x8xi1>, vector<4x8x8xf32>
    %cst_20 = arith.constant dense<0xFF800000> : vector<4x8xf32>
    %52 = vector.multi_reduction <maximumf>, %51, %cst_20 [2] : vector<4x8x8xf32> to vector<4x8xf32>
    %53 = vector.shape_cast %52 : vector<4x8xf32> to vector<4x8x1xf32>
    %54 = vector.broadcast %53 : vector<4x8x1xf32> to vector<4x8x8xf32>
    %55 = arith.subf %51, %54 : vector<4x8x8xf32>
    %56 = math.exp %55 : vector<4x8x8xf32>
    %cst_21 = arith.constant dense<0.000000e+00> : vector<4x8xf32>
    %57 = vector.multi_reduction <add>, %56, %cst_21 [2] : vector<4x8x8xf32> to vector<4x8xf32>
    %58 = vector.shape_cast %57 : vector<4x8xf32> to vector<4x8x1xf32>
    %59 = vector.broadcast %58 : vector<4x8x1xf32> to vector<4x8x8xf32>
    %60 = arith.divf %56, %59 : vector<4x8x8xf32>
    "tpu.trace_start"() <{level = 10 : i32, message = "bqk,bkd->bqd"}> : () -> ()
    %cst_22 = arith.constant dense<0.000000e+00> : vector<4x8x16xf32>
    %61 = tpu.matmul %60, %48, %cst_22 {dimension_numbers = #tpu.dot_dimension_numbers<[2], [1], [1], [2], [0, 0, 0, 1, 1, 2], [0], [0]>} : vector<4x8x8xf32>, vector<4x8x16xf32>, vector<4x8x16xf32> -> vector<4x8x16xf32>
    "tpu.trace_stop"() : () -> ()
    %62 = vector.extract_strided_slice %61 {offsets = [0, 0, 0], sizes = [2, 8, 16], strides = [1, 1, 1]} : vector<4x8x16xf32> to vector<2x8x16xf32>
    %63 = vector.shape_cast %62 : vector<2x8x16xf32> to vector<16x16xf32>
    %64 = vector.extract_strided_slice %61 {offsets = [2, 0, 0], sizes = [2, 8, 16], strides = [1, 1, 1]} : vector<4x8x16xf32> to vector<2x8x16xf32>
    %65 = vector.shape_cast %64 : vector<2x8x16xf32> to vector<16x16xf32>
    %66 = tpu.concatenate %63, %65 in 1 : vector<16x16xf32>, vector<16x16xf32> -> vector<16x32xf32>
    %c0_23 = arith.constant 0 : index
    %c512 = arith.constant 512 : index
    %67 = vector.load %arg3[%c0_23, %c512] : memref<128x1408xf32, #tpu.memory_space<vmem>>, vector<32x32xf32>
    %cst_24 = arith.constant dense<0.000000e+00> : vector<16x32xf32>
    %68 = tpu.matmul %66, %67, %cst_24 {dimension_numbers = #tpu.dot_dimension_numbers<[1], [0], [0], [1], [0, 0, 1, 1], [], []>} : vector<16x32xf32>, vector<32x32xf32>, vector<16x32xf32> -> vector<16x32xf32>
    %69 = arith.addf %11, %68 : vector<16x32xf32>
    %c5 = arith.constant 5 : index
    %c0_25 = arith.constant 0 : index
    %70 = vector.load %arg4[%c5, %c0_25] : memref<16x128xf32, #tpu.memory_space<vmem>>, vector<1x32xf32>
    %71 = vector.broadcast %70 : vector<1x32xf32> to vector<16x32xf32>
    %72 = arith.addf %69, %71 : vector<16x32xf32>
    %c6 = arith.constant 6 : index
    %c0_26 = arith.constant 0 : index
    %73 = vector.load %arg4[%c6, %c0_26] : memref<16x128xf32, #tpu.memory_space<vmem>>, vector<1x32xf32>
    %74 = arith.mulf %72, %72 : vector<16x32xf32>
    %cst_27 = arith.constant dense<0.000000e+00> : vector<16xf32>
    %75 = vector.multi_reduction <add>, %74, %cst_27 [1] : vector<16x32xf32> to vector<16xf32>
    %76 = vector.shape_cast %75 : vector<16xf32> to vector<16x1xf32>
    %cst_28 = arith.constant 3.200000e+01 : f32
    %77 = vector.broadcast %cst_28 : f32 to vector<16x1xf32>
    %78 = arith.divf %76, %77 : vector<16x1xf32>
    %cst_29 = arith.constant 1.1920929E-7 : f32
    %79 = vector.broadcast %cst_29 : f32 to vector<16x1xf32>
    %80 = arith.addf %78, %79 : vector<16x1xf32>
    %81 = math.rsqrt %80 : vector<16x1xf32>
    %82 = vector.broadcast %81 : vector<16x1xf32> to vector<16x32xf32>
    %83 = arith.mulf %72, %82 : vector<16x32xf32>
    %84 = vector.broadcast %73 : vector<1x32xf32> to vector<16x32xf32>
    %85 = arith.mulf %83, %84 : vector<16x32xf32>
    %c0_30 = arith.constant 0 : index
    %c640 = arith.constant 640 : index
    %86 = vector.load %arg3[%c0_30, %c640] : memref<128x1408xf32, #tpu.memory_space<vmem>>, vector<32x128xf32>
    %cst_31 = arith.constant dense<0.000000e+00> : vector<16x128xf32>
    %87 = tpu.matmul %85, %86, %cst_31 {dimension_numbers = #tpu.dot_dimension_numbers<[1], [0], [0], [1], [0, 0, 1, 1], [], []>} : vector<16x32xf32>, vector<32x128xf32>, vector<16x128xf32> -> vector<16x128xf32>
    %c7 = arith.constant 7 : index
    %c0_32 = arith.constant 0 : index
    %88 = vector.load %arg4[%c7, %c0_32] : memref<16x128xf32, #tpu.memory_space<vmem>>, vector<1x128xf32>
    %89 = vector.broadcast %88 : vector<1x128xf32> to vector<16x128xf32>
    %90 = arith.addf %87, %89 : vector<16x128xf32>
    %91 = vector.extract_strided_slice %90 {offsets = [0, 0], sizes = [16, 64], strides = [1, 1]} : vector<16x128xf32> to vector<16x64xf32>
    %92 = vector.extract_strided_slice %90 {offsets = [0, 64], sizes = [16, 64], strides = [1, 1]} : vector<16x128xf32> to vector<16x64xf32>
    %93 = arith.negf %91 : vector<16x64xf32>
    %94 = math.exp %93 : vector<16x64xf32>
    %cst_33 = arith.constant 1.000000e+00 : f32
    %95 = vector.broadcast %cst_33 : f32 to vector<16x64xf32>
    %96 = arith.addf %95, %94 : vector<16x64xf32>
    %97 = arith.divf %95, %96 : vector<16x64xf32>
    %98 = arith.mulf %91, %97 : vector<16x64xf32>
    %99 = arith.mulf %98, %92 : vector<16x64xf32>
    %c0_34 = arith.constant 0 : index
    %c768 = arith.constant 768 : index
    %100 = vector.load %arg3[%c0_34, %c768] : memref<128x1408xf32, #tpu.memory_space<vmem>>, vector<64x32xf32>
    %cst_35 = arith.constant dense<0.000000e+00> : vector<16x32xf32>
    %101 = tpu.matmul %99, %100, %cst_35 {dimension_numbers = #tpu.dot_dimension_numbers<[1], [0], [0], [1], [0, 0, 1, 1], [], []>} : vector<16x64xf32>, vector<64x32xf32>, vector<16x32xf32> -> vector<16x32xf32>
    %102 = arith.addf %72, %101 : vector<16x32xf32>
    %c8 = arith.constant 8 : index
    %c0_36 = arith.constant 0 : index
    %103 = vector.load %arg4[%c8, %c0_36] : memref<16x128xf32, #tpu.memory_space<vmem>>, vector<1x32xf32>
    %104 = vector.broadcast %103 : vector<1x32xf32> to vector<16x32xf32>
    %105 = arith.addf %102, %104 : vector<16x32xf32>
    %c9 = arith.constant 9 : index
    %c0_37 = arith.constant 0 : index
    %106 = vector.load %arg4[%c9, %c0_37] : memref<16x128xf32, #tpu.memory_space<vmem>>, vector<1x32xf32>
    %107 = arith.mulf %105, %105 : vector<16x32xf32>
    %cst_38 = arith.constant dense<0.000000e+00> : vector<16xf32>
    %108 = vector.multi_reduction <add>, %107, %cst_38 [1] : vector<16x32xf32> to vector<16xf32>
    %109 = vector.shape_cast %108 : vector<16xf32> to vector<16x1xf32>
    %cst_39 = arith.constant 3.200000e+01 : f32
    %110 = vector.broadcast %cst_39 : f32 to vector<16x1xf32>
    %111 = arith.divf %109, %110 : vector<16x1xf32>
    %cst_40 = arith.constant 1.1920929E-7 : f32
    %112 = vector.broadcast %cst_40 : f32 to vector<16x1xf32>
    %113 = arith.addf %111, %112 : vector<16x1xf32>
    %114 = math.rsqrt %113 : vector<16x1xf32>
    %115 = vector.broadcast %114 : vector<16x1xf32> to vector<16x32xf32>
    %116 = arith.mulf %105, %115 : vector<16x32xf32>
    %117 = vector.broadcast %106 : vector<1x32xf32> to vector<16x32xf32>
    %118 = arith.mulf %116, %117 : vector<16x32xf32>
    %c0_41 = arith.constant 0 : index
    %c896 = arith.constant 896 : index
    %119 = vector.load %arg3[%c0_41, %c896] : memref<128x1408xf32, #tpu.memory_space<vmem>>, vector<32x128xf32>
    %cst_42 = arith.constant dense<0.000000e+00> : vector<16x128xf32>
    %120 = tpu.matmul %118, %119, %cst_42 {dimension_numbers = #tpu.dot_dimension_numbers<[1], [0], [0], [1], [0, 0, 1, 1], [], []>} : vector<16x32xf32>, vector<32x128xf32>, vector<16x128xf32> -> vector<16x128xf32>
    %c10 = arith.constant 10 : index
    %c0_43 = arith.constant 0 : index
    %121 = vector.load %arg4[%c10, %c0_43] : memref<16x128xf32, #tpu.memory_space<vmem>>, vector<1x128xf32>
    %122 = vector.broadcast %121 : vector<1x128xf32> to vector<16x128xf32>
    %123 = arith.addf %120, %122 : vector<16x128xf32>
    %124 = arith.mulf %123, %0 : vector<16x128xf32>
    %cst_44 = arith.constant dense<0.000000e+00> : vector<16x128xf32>
    %125 = tpu.matmul %123, %2, %cst_44 {dimension_numbers = #tpu.dot_dimension_numbers<[1], [0], [0], [1], [0, 0, 1, 1], [], []>} : vector<16x128xf32>, vector<128x128xf32>, vector<16x128xf32> -> vector<16x128xf32>
    %126 = arith.mulf %125, %1 : vector<16x128xf32>
    %127 = arith.addf %124, %126 : vector<16x128xf32>
    %128 = vector.extract_strided_slice %127 {offsets = [0, 0], sizes = [16, 16], strides = [1, 1]} : vector<16x128xf32> to vector<16x16xf32>
    %129 = vector.shape_cast %128 : vector<16x16xf32> to vector<2x8x16xf32>
    %130 = vector.extract_strided_slice %127 {offsets = [0, 16], sizes = [16, 16], strides = [1, 1]} : vector<16x128xf32> to vector<16x16xf32>
    %131 = vector.shape_cast %130 : vector<16x16xf32> to vector<2x8x16xf32>
    %132 = tpu.concatenate %129, %131 in 0 : vector<2x8x16xf32>, vector<2x8x16xf32> -> vector<4x8x16xf32>
    %133 = vector.extract_strided_slice %127 {offsets = [0, 32], sizes = [16, 16], strides = [1, 1]} : vector<16x128xf32> to vector<16x16xf32>
    %134 = vector.shape_cast %133 : vector<16x16xf32> to vector<2x8x16xf32>
    %135 = vector.extract_strided_slice %127 {offsets = [0, 48], sizes = [16, 16], strides = [1, 1]} : vector<16x128xf32> to vector<16x16xf32>
    %136 = vector.shape_cast %135 : vector<16x16xf32> to vector<2x8x16xf32>
    %137 = tpu.concatenate %134, %136 in 0 : vector<2x8x16xf32>, vector<2x8x16xf32> -> vector<4x8x16xf32>
    %138 = vector.extract_strided_slice %127 {offsets = [0, 64], sizes = [16, 16], strides = [1, 1]} : vector<16x128xf32> to vector<16x16xf32>
    %139 = vector.shape_cast %138 : vector<16x16xf32> to vector<2x8x16xf32>
    %140 = vector.extract_strided_slice %127 {offsets = [0, 80], sizes = [16, 16], strides = [1, 1]} : vector<16x128xf32> to vector<16x16xf32>
    %141 = vector.shape_cast %140 : vector<16x16xf32> to vector<2x8x16xf32>
    %142 = tpu.concatenate %139, %141 in 0 : vector<2x8x16xf32>, vector<2x8x16xf32> -> vector<4x8x16xf32>
    "tpu.trace_start"() <{level = 10 : i32, message = "bqd,bkd->bqk"}> : () -> ()
    %cst_45 = arith.constant dense<0.000000e+00> : vector<4x8x8xf32>
    %143 = tpu.matmul %132, %137, %cst_45 {dimension_numbers = #tpu.dot_dimension_numbers<[2], [2], [1], [1], [0, 0, 0, 1, 1, 1], [0], [0]>} : vector<4x8x16xf32>, vector<4x8x16xf32>, vector<4x8x8xf32> -> vector<4x8x8xf32>
    %cst_46 = arith.constant -1.000000e+30 : f32
    "tpu.trace_stop"() : () -> ()
    %144 = vector.broadcast %cst_46 : f32 to vector<4x8x8xf32>
    %145 = arith.select %5, %143, %144 : vector<4x8x8xi1>, vector<4x8x8xf32>
    %cst_47 = arith.constant dense<0xFF800000> : vector<4x8xf32>
    %146 = vector.multi_reduction <maximumf>, %145, %cst_47 [2] : vector<4x8x8xf32> to vector<4x8xf32>
    %147 = vector.shape_cast %146 : vector<4x8xf32> to vector<4x8x1xf32>
    %148 = vector.broadcast %147 : vector<4x8x1xf32> to vector<4x8x8xf32>
    %149 = arith.subf %145, %148 : vector<4x8x8xf32>
    %150 = math.exp %149 : vector<4x8x8xf32>
    %cst_48 = arith.constant dense<0.000000e+00> : vector<4x8xf32>
    %151 = vector.multi_reduction <add>, %150, %cst_48 [2] : vector<4x8x8xf32> to vector<4x8xf32>
    %152 = vector.shape_cast %151 : vector<4x8xf32> to vector<4x8x1xf32>
    %153 = vector.broadcast %152 : vector<4x8x1xf32> to vector<4x8x8xf32>
    %154 = arith.divf %150, %153 : vector<4x8x8xf32>
    "tpu.trace_start"() <{level = 10 : i32, message = "bqk,bkd->bqd"}> : () -> ()
    %cst_49 = arith.constant dense<0.000000e+00> : vector<4x8x16xf32>
    %155 = tpu.matmul %154, %142, %cst_49 {dimension_numbers = #tpu.dot_dimension_numbers<[2], [1], [1], [2], [0, 0, 0, 1, 1, 2], [0], [0]>} : vector<4x8x8xf32>, vector<4x8x16xf32>, vector<4x8x16xf32> -> vector<4x8x16xf32>
    "tpu.trace_stop"() : () -> ()
    %156 = vector.extract_strided_slice %155 {offsets = [0, 0, 0], sizes = [2, 8, 16], strides = [1, 1, 1]} : vector<4x8x16xf32> to vector<2x8x16xf32>
    %157 = vector.shape_cast %156 : vector<2x8x16xf32> to vector<16x16xf32>
    %158 = vector.extract_strided_slice %155 {offsets = [2, 0, 0], sizes = [2, 8, 16], strides = [1, 1, 1]} : vector<4x8x16xf32> to vector<2x8x16xf32>
    %159 = vector.shape_cast %158 : vector<2x8x16xf32> to vector<16x16xf32>
    %160 = tpu.concatenate %157, %159 in 1 : vector<16x16xf32>, vector<16x16xf32> -> vector<16x32xf32>
    %c0_50 = arith.constant 0 : index
    %c1024 = arith.constant 1024 : index
    %161 = vector.load %arg3[%c0_50, %c1024] : memref<128x1408xf32, #tpu.memory_space<vmem>>, vector<32x32xf32>
    %cst_51 = arith.constant dense<0.000000e+00> : vector<16x32xf32>
    %162 = tpu.matmul %160, %161, %cst_51 {dimension_numbers = #tpu.dot_dimension_numbers<[1], [0], [0], [1], [0, 0, 1, 1], [], []>} : vector<16x32xf32>, vector<32x32xf32>, vector<16x32xf32> -> vector<16x32xf32>
    %163 = arith.addf %105, %162 : vector<16x32xf32>
    %c11 = arith.constant 11 : index
    %c0_52 = arith.constant 0 : index
    %164 = vector.load %arg4[%c11, %c0_52] : memref<16x128xf32, #tpu.memory_space<vmem>>, vector<1x32xf32>
    %165 = vector.broadcast %164 : vector<1x32xf32> to vector<16x32xf32>
    %166 = arith.addf %163, %165 : vector<16x32xf32>
    %c12 = arith.constant 12 : index
    %c0_53 = arith.constant 0 : index
    %167 = vector.load %arg4[%c12, %c0_53] : memref<16x128xf32, #tpu.memory_space<vmem>>, vector<1x32xf32>
    %168 = arith.mulf %166, %166 : vector<16x32xf32>
    %cst_54 = arith.constant dense<0.000000e+00> : vector<16xf32>
    %169 = vector.multi_reduction <add>, %168, %cst_54 [1] : vector<16x32xf32> to vector<16xf32>
    %170 = vector.shape_cast %169 : vector<16xf32> to vector<16x1xf32>
    %cst_55 = arith.constant 3.200000e+01 : f32
    %171 = vector.broadcast %cst_55 : f32 to vector<16x1xf32>
    %172 = arith.divf %170, %171 : vector<16x1xf32>
    %cst_56 = arith.constant 1.1920929E-7 : f32
    %173 = vector.broadcast %cst_56 : f32 to vector<16x1xf32>
    %174 = arith.addf %172, %173 : vector<16x1xf32>
    %175 = math.rsqrt %174 : vector<16x1xf32>
    %176 = vector.broadcast %175 : vector<16x1xf32> to vector<16x32xf32>
    %177 = arith.mulf %166, %176 : vector<16x32xf32>
    %178 = vector.broadcast %167 : vector<1x32xf32> to vector<16x32xf32>
    %179 = arith.mulf %177, %178 : vector<16x32xf32>
    %c0_57 = arith.constant 0 : index
    %c1152 = arith.constant 1152 : index
    %180 = vector.load %arg3[%c0_57, %c1152] : memref<128x1408xf32, #tpu.memory_space<vmem>>, vector<32x128xf32>
    %cst_58 = arith.constant dense<0.000000e+00> : vector<16x128xf32>
    %181 = tpu.matmul %179, %180, %cst_58 {dimension_numbers = #tpu.dot_dimension_numbers<[1], [0], [0], [1], [0, 0, 1, 1], [], []>} : vector<16x32xf32>, vector<32x128xf32>, vector<16x128xf32> -> vector<16x128xf32>
    %c13 = arith.constant 13 : index
    %c0_59 = arith.constant 0 : index
    %182 = vector.load %arg4[%c13, %c0_59] : memref<16x128xf32, #tpu.memory_space<vmem>>, vector<1x128xf32>
    %183 = vector.broadcast %182 : vector<1x128xf32> to vector<16x128xf32>
    %184 = arith.addf %181, %183 : vector<16x128xf32>
    %185 = vector.extract_strided_slice %184 {offsets = [0, 0], sizes = [16, 64], strides = [1, 1]} : vector<16x128xf32> to vector<16x64xf32>
    %186 = vector.extract_strided_slice %184 {offsets = [0, 64], sizes = [16, 64], strides = [1, 1]} : vector<16x128xf32> to vector<16x64xf32>
    %187 = arith.negf %185 : vector<16x64xf32>
    %188 = math.exp %187 : vector<16x64xf32>
    %cst_60 = arith.constant 1.000000e+00 : f32
    %189 = vector.broadcast %cst_60 : f32 to vector<16x64xf32>
    %190 = arith.addf %189, %188 : vector<16x64xf32>
    %191 = arith.divf %189, %190 : vector<16x64xf32>
    %192 = arith.mulf %185, %191 : vector<16x64xf32>
    %193 = arith.mulf %192, %186 : vector<16x64xf32>
    %c0_61 = arith.constant 0 : index
    %c1280 = arith.constant 1280 : index
    %194 = vector.load %arg3[%c0_61, %c1280] : memref<128x1408xf32, #tpu.memory_space<vmem>>, vector<64x32xf32>
    %cst_62 = arith.constant dense<0.000000e+00> : vector<16x32xf32>
    %195 = tpu.matmul %193, %194, %cst_62 {dimension_numbers = #tpu.dot_dimension_numbers<[1], [0], [0], [1], [0, 0, 1, 1], [], []>} : vector<16x64xf32>, vector<64x32xf32>, vector<16x32xf32> -> vector<16x32xf32>
    %196 = arith.addf %166, %195 : vector<16x32xf32>
    %c14 = arith.constant 14 : index
    %c0_63 = arith.constant 0 : index
    %197 = vector.load %arg4[%c14, %c0_63] : memref<16x128xf32, #tpu.memory_space<vmem>>, vector<1x32xf32>
    %198 = vector.broadcast %197 : vector<1x32xf32> to vector<16x32xf32>
    %199 = arith.addf %196, %198 : vector<16x32xf32>
    %c1 = arith.constant 1 : index
    %c0_64 = arith.constant 0 : index
    %200 = vector.load %arg4[%c1, %c0_64] : memref<16x128xf32, #tpu.memory_space<vmem>>, vector<1x32xf32>
    %201 = arith.mulf %199, %199 : vector<16x32xf32>
    %cst_65 = arith.constant dense<0.000000e+00> : vector<16xf32>
    %202 = vector.multi_reduction <add>, %201, %cst_65 [1] : vector<16x32xf32> to vector<16xf32>
    %203 = vector.shape_cast %202 : vector<16xf32> to vector<16x1xf32>
    %cst_66 = arith.constant 3.200000e+01 : f32
    %204 = vector.broadcast %cst_66 : f32 to vector<16x1xf32>
    %205 = arith.divf %203, %204 : vector<16x1xf32>
    %cst_67 = arith.constant 1.1920929E-7 : f32
    %206 = vector.broadcast %cst_67 : f32 to vector<16x1xf32>
    %207 = arith.addf %205, %206 : vector<16x1xf32>
    %208 = math.rsqrt %207 : vector<16x1xf32>
    %209 = vector.broadcast %208 : vector<16x1xf32> to vector<16x32xf32>
    %210 = arith.mulf %199, %209 : vector<16x32xf32>
    %211 = vector.broadcast %200 : vector<1x32xf32> to vector<16x32xf32>
    %212 = arith.mulf %210, %211 : vector<16x32xf32>
    %c0_68 = arith.constant 0 : index
    %c256 = arith.constant 256 : index
    %213 = vector.load %arg3[%c0_68, %c256] : memref<128x1408xf32, #tpu.memory_space<vmem>>, vector<32x128xf32>
    %cst_69 = arith.constant dense<0.000000e+00> : vector<16x128xf32>
    %214 = tpu.matmul %212, %213, %cst_69 {dimension_numbers = #tpu.dot_dimension_numbers<[1], [0], [0], [1], [0, 0, 1, 1], [], []>} : vector<16x32xf32>, vector<32x128xf32>, vector<16x128xf32> -> vector<16x128xf32>
    %c2 = arith.constant 2 : index
    %c0_70 = arith.constant 0 : index
    %215 = vector.load %arg4[%c2, %c0_70] : memref<16x128xf32, #tpu.memory_space<vmem>>, vector<1x128xf32>
    %216 = vector.broadcast %215 : vector<1x128xf32> to vector<16x128xf32>
    %217 = arith.addf %214, %216 : vector<16x128xf32>
    %c0_71 = arith.constant 0 : index
    %c0_72 = arith.constant 0 : index
    %218 = vector.load %arg5[%c0_71, %c0_72] : memref<16x128xf32, #tpu.memory_space<vmem>>, vector<16x128xf32>
    tpu.vector_store %arg5[%c0_71, %c0_72], %217 {strides = array<i32>} : memref<16x128xf32, #tpu.memory_space<vmem>>, vector<16x128xf32>,
    return
  }
}

</mosaic_0001>

<llo_original>
// kernel: mul.8
$region0: #{mul.8}
  %s0 = inlined_call_operand.vmem [shape: f32[2,8], index: 0, kind: input, shape index: {}]
  %s1 = inlined_call_operand.vmem [shape: f32[16], index: 1, kind: output, shape index: {}]
  $region1: #{mul.8} parent=0
    #allocation0 [shape = 'u8[4096]{0}', space=vmem, size = 0x1000, scoped, tag = 'scoped mem for output reshape']
    #allocation1 [shape = 'u8[4096]{0}', space=vmem, size = 0x1000, scoped, tag = 'scoped mem for input reshape']
    %s3 = ssub.s32 4, 1
    %v4 = vld [vmem:[%s0] sm:%s3]
    %5 = vst [vmem:[#allocation1] sm:%s3] %v4
    %v6 = vld [vmem:[#allocation1] sm:$0x1]
    %vm7 = vcmask 64512
    %8 = vst.msk [vmem:[#allocation0] sm:$0x1] %vm7, %v6
    %s9 = scalar_lea.vmem [#allocation1], 1
    %v10 = vld [vmem:[%s9] sm:$0x1]
    %11 = vrot.lane.b32.xlu0 %v10, 8
    %v12 = vpop.permute.xlu0 %11
    %vm13 = vcmask 130112
    %14 = vst.msk [vmem:[#allocation0] sm:$0x1] %vm13, %v12
    %s16 = ssub.s32 2, 1
    %v17 = vld [vmem:[#allocation0] sm:%s16]
    %s19 = ssub.s32 2, 1
    %20 = vst [vmem:[%s1] sm:%s19] %v17

// kernel: tile.14
$region0: #{tile.14}
  %s0 = inlined_call_operand.vmem [shape: f32[16,4,16], index: 0, kind: input, shape index: {}]
  %s1 = inlined_call_operand.vmem [shape: f32[16,64], index: 1, kind: output, shape index: {}]
  $region1: #{tile.14} parent=0
    #allocation0 [shape = 'u8[65536]{0}', space=vmem, size = 0x10000, scoped, tag = 'scoped mem for input reshape']
    %s3 = ssub.s32 16, 1
    %s4 = scalar_lea.vmem %s0, 60
    %v5 = vld [vmem:[%s4] sm:%s3]
    %s6 = scalar_lea.vmem [#allocation0], 120
    %7 = vst [vmem:[%s6] sm:%s3] %v5
    %s8 = scalar_lea.vmem %s0, 56
    %v9 = vld [vmem:[%s8] sm:%s3]
    %s10 = scalar_lea.vmem [#allocation0], 112
    %11 = vst [vmem:[%s10] sm:%s3] %v9
    %s12 = scalar_lea.vmem %s0, 52
    %v13 = vld [vmem:[%s12] sm:%s3]
    %s14 = scalar_lea.vmem [#allocation0], 104
    %15 = vst [vmem:[%s14] sm:%s3] %v13
    %s16 = scalar_lea.vmem %s0, 48
    %v17 = vld [vmem:[%s16] sm:%s3]
    %s18 = scalar_lea.vmem [#allocation0], 96
    %19 = vst [vmem:[%s18] sm:%s3] %v17
    %s20 = scalar_lea.vmem %s0, 44
    %v21 = vld [vmem:[%s20] sm:%s3]
    %s22 = scalar_lea.vmem [#allocation0], 88
    %23 = vst [vmem:[%s22] sm:%s3] %v21
    %s24 = scalar_lea.vmem %s0, 40
    %v25 = vld [vmem:[%s24] sm:%s3]
    %s26 = scalar_lea.vmem [#allocation0], 80
    %27 = vst [vmem:[%s26] sm:%s3] %v25
    %s28 = scalar_lea.vmem %s0, 36
    %v29 = vld [vmem:[%s28] sm:%s3]
    %s30 = scalar_lea.vmem [#allocation0], 72
    %31 = vst [vmem:[%s30] sm:%s3] %v29
    %s32 = scalar_lea.vmem %s0, 32
    %v33 = vld [vmem:[%s32] sm:%s3]
    %s34 = scalar_lea.vmem [#allocation0], 64
    %35 = vst [vmem:[%s34] sm:%s3] %v33
    %s36 = scalar_lea.vmem %s0, 28
    %v37 = vld [vmem:[%s36] sm:%s3]
    %s38 = scalar_lea.vmem [#allocation0], 56
    %39 = vst [vmem:[%s38] sm:%s3] %v37
    %s40 = scalar_lea.vmem %s0, 24
    %v41 = vld [vmem:[%s40] sm:%s3]
    %s42 = scalar_lea.vmem [#allocation0], 48
    %43 = vst [vmem:[%s42] sm:%s3] %v41
    %s44 = scalar_lea.vmem %s0, 20
    %v45 = vld [vmem:[%s44] sm:%s3]
    %s46 = scalar_lea.vmem [#allocation0], 40
    %47 = vst [vmem:[%s46] sm:%s3] %v45
    %s48 = scalar_lea.vmem %s0, 16
    %v49 = vld [vmem:[%s48] sm:%s3]
    %s50 = scalar_lea.vmem [#allocation0], 32
    %51 = vst [vmem:[%s50] sm:%s3] %v49
    %s52 = scalar_lea.vmem %s0, 12
    %v53 = vld [vmem:[%s52] sm:%s3]
    %s54 = scalar_lea.vmem [#allocation0], 24
    %55 = vst [vmem:[%s54] sm:%s3] %v53
    %s56 = scalar_lea.vmem %s0, 8
    %v57 = vld [vmem:[%s56] sm:%s3]
    %s58 = scalar_lea.vmem [#allocation0], 16
    %59 = vst [vmem:[%s58] sm:%s3] %v57
    %s60 = scalar_lea.vmem %s0, 4
    %v61 = vld [vmem:[%s60] sm:%s3]
    %s62 = scalar_lea.vmem [#allocation0], 8
    %63 = vst [vmem:[%s62] sm:%s3] %v61
    %v64 = vld [vmem:[%s0] sm:%s3]
    %65 = vst [vmem:[#allocation0] sm:%s3] %v64
    %v66 = vld [vmem:[#allocation0] ss:$8 sm:$0xf]
    %v67 = vld [vmem:[#allocation0] ss:$8 sm:$0xf0]
    %vm68 = vcmask 1047556
    %v69 = vsel %vm68, %v67, %v66
    %vm70 = vcmask 130048
    %71 = vst.msk [vmem:[%s1] sm:$0xff] %vm70, %v69
    %s72 = scalar_lea.vmem [#allocation0], 64
    %v73 = vld [vmem:[%s72] ss:$8 sm:$0xf]
    %s74 = scalar_lea.vmem [#allocation0], 64
    %v75 = vld [vmem:[%s74] ss:$8 sm:$0xf0]
    %vm76 = vcmask 1047556
    %v77 = vsel %vm76, %v75, %v73
    %vm78 = vcmask 130048
    %s79 = scalar_lea.vmem %s1, 8
    %80 = vst.msk [vmem:[%s79] sm:$0xff] %vm78, %v77
    %s81 = scalar_lea.vmem [#allocation0], 3
    %v82 = vld [vmem:[%s81] ss:$8 sm:$0xf]
    %s83 = scalar_lea.vmem [#allocation0], 3
    %v84 = vld [vmem:[%s83] ss:$8 sm:$0xf0]
    %vm85 = vcmask 1047556
    %v86 = vsel %vm85, %v84, %v82
    %87 = vrot.lane.b32.xlu0 %v86, 48
    %v88 = vpop.permute.xlu0 %87
    %vm89 = vcmask 523648
    %90 = vst.msk [vmem:[%s1] sm:$0xff] %vm89, %v88
    %s91 = scalar_lea.vmem [#allocation0], 67
    %v92 = vld [vmem:[%s91] ss:$8 sm:$0xf]
    %s93 = scalar_lea.vmem [#allocation0], 67
    %v94 = vld [vmem:[%s93] ss:$8 sm:$0xf0]
    %vm95 = vcmask 1047556
    %v96 = vsel %vm95, %v94, %v92
    %97 = vrot.lane.b32.xlu0 %v96, 48
    %v98 = vpop.permute.xlu0 %97
    %vm99 = vcmask 523648
    %s100 = scalar_lea.vmem %s1, 8
    %101 = vst.msk [vmem:[%s100] sm:$0xff] %vm99, %v98
    %s102 = scalar_lea.vmem [#allocation0], 2
    %v103 = vld [vmem:[%s102] ss:$8 sm:$0xf]
    %s104 = scalar_lea.vmem [#allocation0], 2
    %v105 = vld [vmem:[%s104] ss:$8 sm:$0xf0]
    %vm106 = vcmask 1047556
    %v107 = vsel %vm106, %v105, %v103
    %108 = vrot.lane.b32.xlu0 %v107, 32
    %v109 = vpop.permute.xlu0 %108
    %vm110 = vcmask 392448
    %111 = vst.msk [vmem:[%s1] sm:$0xff] %vm110, %v109
    %s112 = scalar_lea.vmem [#allocation0], 66
    %v113 = vld [vmem:[%s112] ss:$8 sm:$0xf]
    %s114 = scalar_lea.vmem [#allocation0], 66
    %v115 = vld [vmem:[%s114] ss:$8 sm:$0xf0]
    %vm116 = vcmask 1047556
    %v117 = vsel %vm116, %v115, %v113
    %118 = vrot.lane.b32.xlu0 %v117, 32
    %v119 = vpop.permute.xlu0 %118
    %vm120 = vcmask 392448
    %s121 = scalar_lea.vmem %s1, 8
    %122 = vst.msk [vmem:[%s121] sm:$0xff] %vm120, %v119
    %s123 = scalar_lea.vmem [#allocation0], 1
    %v124 = vld [vmem:[%s123] ss:$8 sm:$0xf]
    %s125 = scalar_lea.vmem [#allocation0], 1
    %v126 = vld [vmem:[%s125] ss:$8 sm:$0xf0]
    %vm127 = vcmask 1047556
    %v128 = vsel %vm127, %v126, %v124
    %129 = vrot.lane.b32.xlu0 %v128, 16
    %v130 = vpop.permute.xlu0 %129
    %vm131 = vcmask 261248
    %132 = vst.msk [vmem:[%s1] sm:$0xff] %vm131, %v130
    %s133 = scalar_lea.vmem [#allocation0], 65
    %v134 = vld [vmem:[%s133] ss:$8 sm:$0xf]
    %s135 = scalar_lea.vmem [#allocation0], 65
    %v136 = vld [vmem:[%s135] ss:$8 sm:$0xf0]
    %vm137 = vcmask 1047556
    %v138 = vsel %vm137, %v136, %v134
    %139 = vrot.lane.b32.xlu0 %v138, 16
    %v140 = vpop.permute.xlu0 %139
    %vm141 = vcmask 261248
    %s142 = scalar_lea.vmem %s1, 8
    %143 = vst.msk [vmem:[%s142] sm:$0xff] %vm141, %v140

// kernel: squeeze.1
$region0: #{squeeze.1}
  %s0 = inlined_call_operand.vmem [shape: f32[16], index: 0, kind: input, shape index: {}]
  %s1 = inlined_call_operand.hbm [shape: f32[2,8], index: 1, kind: output, shape index: {}]
  $region1: #{squeeze.1} parent=0
    #allocation0 [shape = 'u8[1024]{0}', space=vmem, size = 0x400, scoped, tag = 'operand span for operand 1']
    #allocation1 [shape = 's32[1]{0}', space=sflag, size = 0x4, scoped, tag = 'scoped memory for squeeze.1']
    #allocation2 [shape = 'u8[4096]{0}', space=vmem, size = 0x1000, scoped, tag = 'scoped mem for output reshape']
    #allocation3 [shape = 'u8[4096]{0}', space=vmem, size = 0x1000, scoped, tag = 'scoped mem for input reshape']
    %2 = vsyncpa [#allocation1], 0
    %s4 = ssub.s32 2, 1
    %v5 = vld [vmem:[%s0] sm:%s4]
    %6 = vst [vmem:[#allocation3] sm:%s4] %v5
    %v7 = vld [vmem:[#allocation3] sm:$0x1]
    %vm8 = vcmask 64512
    %9 = vst.msk [vmem:[#allocation2] sm:$0x1] %vm8, %v7
    %v10 = vld [vmem:[#allocation3] sm:$0x1]
    %11 = vrot.lane.b32.xlu0 %v10, 120
    %v12 = vpop.permute.xlu0 %11
    %vm13 = vcmask 64512
    %s14 = scalar_lea.vmem [#allocation2], 1
    %15 = vst.msk [vmem:[%s14] sm:$0x1] %vm13, %v12
    %s17 = ssub.s32 4, 1
    %v18 = vld [vmem:[#allocation2] sm:%s17]
    %s20 = ssub.s32 4, 1
    %21 = vst [vmem:[#allocation0] sm:%s20] %v18
    %23 = vsyncadd [#allocation1], 0
    %s25 = sshll.u32 [#allocation0], 4
    %s26 = int_to_ptr.vmem [resolvable:$true] %s25
    %s27 = sshll.u32 %s1, 4
    %s28 = int_to_ptr.hbm [resolvable:$true] %s27
    %30 = dma.vmem_to_hbm [thread:$0]  %s26, 32, %s28, [#allocation1]
    %32 = dma.done [#allocation1], 32
    %33 = vsyncpa [#allocation1], 1

// kernel: forward.1
$region0: #{forward.1}
  #allocation0 [shape = 'u32[]', space=smem, size = 0x4, offset = 0x4, fixed_abs, tag = 'smem constant byte address 0x4 - core index']
  #allocation1 [shape = 'u32[72,128]{1,0:T(1,128)}', space=vmem, size = 0x9000, scoped, tag = 'internal scratch']
  %s0 = inlined_call_operand.vmem [shape: f32[16,4], index: 0, kind: input, shape index: {}]
  %s1 = inlined_call_operand.vmem [shape: f32[16,128], index: 1, kind: input, shape index: {}]
  %s2 = inlined_call_operand.vmem [shape: f32[16,128], index: 2, kind: input, shape index: {}]
  %s3 = inlined_call_operand.hbm [shape: f32[128,1408], index: 3, kind: input, shape index: {}]
  %s4 = inlined_call_operand.vmem [shape: f32[16,128], index: 4, kind: input, shape index: {}]
  %s5 = inlined_call_operand.vmem [shape: f32[16,128], index: 5, kind: output, shape index: {}]
  %s6 = sld [smem:[#allocation0]]
  $region34: #{forward.1} parent=0
    _
  %s8 = ssub.s32 1, %s6
  %s9 = scalar_select 0, %s8, %s6
  $region1: #{forward.1} parent=0
    #allocation2 [shape = 'u8[720896]{0}', space=vmem, size = 0xb0000, scoped, tag = 'input window, operand 3, single buffered']
    #allocation3 [shape = 's32[1]{0}', space=sflag, size = 0x4, scoped, tag = 'scoped memory for forward.1']
    %10 = vsyncpa [#allocation3], 0
    // Predicated region
    $region2: #{forward.1} parent=1 // pred_check
      _
    $region3: #{forward.1} parent=1 // pred_check_branch
      %12 = sbr.rel (0) target = $region5
    $region4: #{forward.1} parent=1 // pred_region
      _
    $region5: #{forward.1} parent=1 // pred_fallthru
      _
    // Predicated region
    $region6: #{forward.1} parent=1 // pred_check
      _
    $region7: #{forward.1} parent=1 // pred_check_branch
      %14 = sbr.rel (0) target = $region9
    $region8: #{forward.1} parent=1 // pred_region
      _
    $region9: #{forward.1} parent=1 // pred_fallthru
      _
    // Predicated region
    $region10: #{forward.1} parent=1 // pred_check
      _
    $region11: #{forward.1} parent=1 // pred_check_branch
      %16 = sbr.rel (0) target = $region13
    $region12: #{forward.1} parent=1 // pred_region
      _
    $region13: #{forward.1} parent=1 // pred_fallthru
      _
    // Predicated region
    $region14: #{forward.1} parent=1 // pred_check
      _
    $region15: #{forward.1} parent=1 // pred_check_branch
      %18 = sbr.rel (0) target = $region17
    $region16: #{forward.1} parent=1 // pred_region
      %20 = vsyncadd [#allocation3], 0
      %s21 = sshll.u32 %s3, 4
      %s22 = int_to_ptr.hbm [resolvable:$true] %s21
      %s23 = sshll.u32 [#allocation2], 4
      %s24 = int_to_ptr.vmem [resolvable:$true] %s23
      %29 = dma.hbm_to_vmem [thread:$0]  %s22, 22528, %s24, [#allocation3], 1408, 1408, 88
    $region17: #{forward.1} parent=1 // pred_fallthru
      _
    // Predicated region
    $region18: #{forward.1} parent=1 // pred_check
      _
    $region19: #{forward.1} parent=1 // pred_check_branch
      %31 = sbr.rel (0) target = $region21
    $region20: #{forward.1} parent=1 // pred_region
      _
    $region21: #{forward.1} parent=1 // pred_fallthru
      _
    // Predicated region
    $region22: #{forward.1} parent=1 // pred_check
      _
    $region23: #{forward.1} parent=1 // pred_check_branch
      %33 = sbr.rel (0) target = $region25
    $region24: #{forward.1} parent=1 // pred_region
      %35 = dma.done [#allocation3], 22528
    $region25: #{forward.1} parent=1 // pred_fallthru
      _
    %v36 = vld [vmem:[%s1] sm:$0xff]
    %v37 = vld [vmem:[%s1 + $0x8] sm:$0xff]
    %v38 = vld [vmem:[%s2] sm:$0xff]
    %v39 = vld [vmem:[%s2 + $0x8] sm:$0xff]
    %v40 = vld [vmem:[#allocation2] sm:$0xff]
    %v41 = vld [vmem:[#allocation2 + $0x58] sm:$0xff]
    %v42 = vld [vmem:[#allocation2 + $0xb0] sm:$0xff]
    %v43 = vld [vmem:[#allocation2 + $0x108] sm:$0xff]
    %v44 = vld [vmem:[#allocation2 + $0x160] sm:$0xff]
    %v45 = vld [vmem:[#allocation2 + $0x1b8] sm:$0xff]
    %v46 = vld [vmem:[#allocation2 + $0x210] sm:$0xff]
    %v47 = vld [vmem:[#allocation2 + $0x268] sm:$0xff]
    %v48 = vld [vmem:[#allocation2 + $0x2c0] sm:$0xff]
    %v49 = vld [vmem:[#allocation2 + $0x318] sm:$0xff]
    %v50 = vld [vmem:[#allocation2 + $0x370] sm:$0xff]
    %v51 = vld [vmem:[#allocation2 + $0x3c8] sm:$0xff]
    %v52 = vld [vmem:[#allocation2 + $0x420] sm:$0xff]
    %v53 = vld [vmem:[#allocation2 + $0x478] sm:$0xff]
    %v54 = vld [vmem:[#allocation2 + $0x4d0] sm:$0xff]
    %v55 = vld [vmem:[#allocation2 + $0x528] sm:$0xff]
    %v56 = vlaneseq
    %v57 = vshrl.u32 %v56, 7
    %v58 = vlaneseq
    %v59 = vand.u32 %v58, 127
    %vm60 = vcmp.le.s32.totalorder %v59, %v57
    %v61 = vld [vmem:[%s0] sm:$0xff]
    %v62 = vld [vmem:[%s0 + $0x8] sm:$0xff]
    %v63 = vld [vmem:[#allocation2 + $0x8] sm:$0xf]
    %v64 = vld [vmem:[%s4] sm:$0x1]
    %v65 = vperm.slane %v64, 0
    %vm66 = vcmask 31744
    %v68 = vsel %vm66, %v61, 0
    %v71 = vsel %vm66, %v62, 0
    %vm73 = vcmask 1043456
    %v75 = vsel %vm73, %v63, 0
    %77 = vmatpush.msra.mxu0 0.0
    %78 = vmatpush.msra.mxu0 0.0
    %79 = vmatpush.msra.mxu0 0.0
    %80 = vmatpush.msra.mxu0 0.0
    %81 = vmatpush.msra.mxu0 0.0
    %82 = vmatpush.msra.mxu0 0.0
    %83 = vmatpush.msra.mxu0 0.0
    %84 = vmatpush.msra.mxu0 0.0
    %85 = vmatpush.msra.mxu0 0.0
    %86 = vmatpush.msra.mxu0 0.0
    %87 = vmatpush.msra.mxu0 0.0
    %88 = vmatpush.msra.mxu0 0.0
    %89 = vmatpush.msra.mxu0 0.0
    %90 = vmatpush.msra.mxu0 0.0
    %91 = vmatpush.msra.mxu0 0.0
    %92 = vmatpush.msra.mxu0 %v75
    %93 = vmatmul.f32.gmra.mxu0 %v68
    %v94 = vpop.f32.mrf.mxu0
    %v95 = vadd.f32 %v65, %v94
    %96 = vmatmul.f32.gmra.mxu0 %v71
    %v97 = vpop.f32.mrf.mxu0
    %v98 = vadd.f32 %v65, %v97
    %99 = vdwg.mxu0
    %v100 = vld [vmem:[%s4 + $0x3] sm:$0x1]
    %v101 = vmul.f32 %v95, %v95
    %v102 = vmul.f32 %v98, %v98
    %vm103 = vcmask 261120
    %v104 = vsel %vm103, %v101, 0.0
    %105 = vadd.xlane.f32.xlu0 %v104
    %v106 = vpop.xlane.xlu0 %105
    %v107 = vsel %vm103, %v102, 0.0
    %108 = vadd.xlane.f32.xlu0 %v107
    %v109 = vpop.xlane.xlu0 %108
    %v110 = vrcp.pop 32.0
    %v111 = vmul.f32 32.0, %v110
    %v112 = vsub.f32 1.0, %v111
    %v113 = vmul.f32 %v110, %v112
    %v114 = vadd.f32 %v110, %v113
    %vm115 = vweird.f32 %v110
    %v116 = vsel %vm115, %v110, %v114
    %v117 = vmul.f32 %v106, %v116
    %v118 = vmul.f32 %v109, %v116
    %v119 = vadd.f32 %v117, 1.1920929e-07
    %v120 = vadd.f32 %v118, 1.1920929e-07
    %v121 = vrsqrt.pop %v119
    %v122 = vmul.f32 %v121, %v119
    %v123 = vmul.f32 %v122, %v121
    %v124 = vmul.f32 0.5, %v123
    %v125 = vsub.f32 1.5, %v124
    %v126 = vmul.f32 %v121, %v125
    %vm127 = vweird.f32 %v119
    %vm128 = vweird.f32 %v121
    %vm129 = vmor %vm127, %vm128
    %v130 = vsel %vm129, %v121, %v126
    %v131 = vrsqrt.pop %v120
    %v132 = vmul.f32 %v131, %v120
    %v133 = vmul.f32 %v132, %v131
    %v134 = vmul.f32 0.5, %v133
    %v135 = vsub.f32 1.5, %v134
    %v136 = vmul.f32 %v131, %v135
    %vm137 = vweird.f32 %v120
    %vm138 = vweird.f32 %v131
    %vm139 = vmor %vm137, %vm138
    %v140 = vsel %vm139, %v131, %v136
    %v141 = vmul.f32 %v95, %v130
    %v142 = vmul.f32 %v98, %v140
    %v143 = vperm.slane %v100, 0
    %v144 = vmul.f32 %v141, %v143
    %v145 = vmul.f32 %v142, %v143
    %v146 = vld [vmem:[#allocation2 + $0x18] sm:$0xff]
    %v147 = vld [vmem:[#allocation2 + $0x70] sm:$0xff]
    %v148 = vld [vmem:[#allocation2 + $0xc8] sm:$0xff]
    %v149 = vld [vmem:[#allocation2 + $0x120] sm:$0xff]
    %v150 = vld [vmem:[%s4 + $0x4] sm:$0x1]
    %v151 = vperm.slane %v150, 0
    %v153 = vsel %vm103, %v144, 0
    %v156 = vsel %vm103, %v145, 0
    %158 = vmatpush.msra.mxu0 0.0
    %159 = vmatpush.msra.mxu0 0.0
    %160 = vmatpush.msra.mxu0 0.0
    %161 = vmatpush.msra.mxu0 0.0
    %162 = vmatpush.msra.mxu0 0.0
    %163 = vmatpush.msra.mxu0 0.0
    %164 = vmatpush.msra.mxu0 0.0
    %165 = vmatpush.msra.mxu0 0.0
    %166 = vmatpush.msra.mxu0 0.0
    %167 = vmatpush.msra.mxu0 0.0
    %168 = vmatpush.msra.mxu0 0.0
    %169 = vmatpush.msra.mxu0 0.0
    %170 = vmatpush.msra.mxu0 %v149
    %171 = vmatpush.msra.mxu0 %v148
    %172 = vmatpush.msra.mxu0 %v147
    %173 = vmatpush.msra.mxu0 %v146
    %174 = vmatmul.f32.gmra.mxu0 %v153
    %v175 = vpop.f32.mrf.mxu0
    %v176 = vadd.f32 %v151, %v175
    %177 = vmatmul.f32.gmra.mxu0 %v156
    %v178 = vpop.f32.mrf.mxu0
    %v179 = vadd.f32 %v151, %v178
    %180 = vdwg.mxu0
    %v181 = vmul.f32 %v176, %v36
    %v182 = vmul.f32 %v179, %v37
    %183 = vmatpush.msra.mxu0 %v55
    %184 = vmatpush.msra.mxu0 %v54
    %185 = vmatpush.msra.mxu0 %v53
    %186 = vmatpush.msra.mxu0 %v52
    %187 = vmatpush.msra.mxu0 %v51
    %188 = vmatpush.msra.mxu0 %v50
    %189 = vmatpush.msra.mxu0 %v49
    %190 = vmatpush.msra.mxu0 %v48
    %191 = vmatpush.msra.mxu0 %v47
    %192 = vmatpush.msra.mxu0 %v46
    %193 = vmatpush.msra.mxu0 %v45
    %194 = vmatpush.msra.mxu0 %v44
    %195 = vmatpush.msra.mxu0 %v43
    %196 = vmatpush.msra.mxu0 %v42
    %197 = vmatpush.msra.mxu0 %v41
    %198 = vmatpush.msra.mxu0 %v40
    %199 = vmatmul.f32.gmra.mxu0 %v176
    %v200 = vpop.f32.mrf.mxu0
    %v201 = vadd.f32 0.0, %v200
    %202 = vmatmul.f32.gmra.mxu0 %v179
    %v203 = vpop.f32.mrf.mxu0
    %v204 = vadd.f32 0.0, %v203
    %205 = vdwg.mxu0
    %v206 = vmul.f32 %v201, %v38
    %v207 = vmul.f32 %v204, %v39
    %v208 = vadd.f32 %v181, %v206
    %v209 = vadd.f32 %v182, %v207
    %212 = vrot.lane.b32.xlu0 %v208, 112
    %v213 = vpop.permute.xlu0 %212
    %214 = vrot.lane.b32.xlu0 %v209, 112
    %v215 = vpop.permute.xlu0 %214
    %216 = vrot.lane.b32.xlu0 %v208, 96
    %v217 = vpop.permute.xlu0 %216
    %vm218 = vcmask 130048
    %v219 = vsel %vm218, %v208, 0
    %v221 = vsel %vm218, %v217, 0
    %223 = vmatpush.xpose.msra.mxu0 0.0
    %224 = vmatpush.xpose.msra.mxu0 0.0
    %225 = vmatpush.xpose.msra.mxu0 0.0
    %226 = vmatpush.xpose.msra.mxu0 0.0
    %227 = vmatpush.xpose.msra.mxu0 0.0
    %228 = vmatpush.xpose.msra.mxu0 0.0
    %229 = vmatpush.xpose.msra.mxu0 0.0
    %230 = vmatpush.xpose.msra.mxu0 0.0
    %231 = vmatpush.xpose.msra.mxu0 0.0
    %232 = vmatpush.xpose.msra.mxu0 0.0
    %233 = vmatpush.xpose.msra.mxu0 0.0
    %234 = vmatpush.xpose.msra.mxu0 0.0
    %235 = vmatpush.xpose.msra.mxu0 0.0
    %236 = vmatpush.xpose.msra.mxu0 0.0
    %237 = vmatpush.xpose.msra.mxu0 0.0
    %238 = vmatpush.xpose.msra.mxu0 %v221
    %239 = vmatmul.f32.gmra.mxu0 %v219
    %v240 = vpop.f32.mrf.mxu0
    %v241 = vadd.f32 0.0, %v240
    %242 = vdwg.mxu0
    %243 = vrot.lane.b32.xlu0 %v209, 96
    %v244 = vpop.permute.xlu0 %243
    %v245 = vsel %vm218, %v209, 0
    %v247 = vsel %vm218, %v244, 0
    %249 = vmatpush.xpose.msra.mxu0 0.0
    %250 = vmatpush.xpose.msra.mxu0 0.0
    %251 = vmatpush.xpose.msra.mxu0 0.0
    %252 = vmatpush.xpose.msra.mxu0 0.0
    %253 = vmatpush.xpose.msra.mxu0 0.0
    %254 = vmatpush.xpose.msra.mxu0 0.0
    %255 = vmatpush.xpose.msra.mxu0 0.0
    %256 = vmatpush.xpose.msra.mxu0 0.0
    %257 = vmatpush.xpose.msra.mxu0 0.0
    %258 = vmatpush.xpose.msra.mxu0 0.0
    %259 = vmatpush.xpose.msra.mxu0 0.0
    %260 = vmatpush.xpose.msra.mxu0 0.0
    %261 = vmatpush.xpose.msra.mxu0 0.0
    %262 = vmatpush.xpose.msra.mxu0 0.0
    %263 = vmatpush.xpose.msra.mxu0 0.0
    %264 = vmatpush.xpose.msra.mxu0 %v247
    %265 = vmatmul.f32.gmra.mxu0 %v245
    %v266 = vpop.f32.mrf.mxu0
    %v267 = vadd.f32 0.0, %v266
    %268 = vdwg.mxu0
    %269 = vrot.lane.b32.xlu0 %v213, 96
    %v270 = vpop.permute.xlu0 %269
    %v271 = vsel %vm218, %v213, 0
    %v273 = vsel %vm218, %v270, 0
    %275 = vmatpush.xpose.msra.mxu0 0.0
    %276 = vmatpush.xpose.msra.mxu0 0.0
    %277 = vmatpush.xpose.msra.mxu0 0.0
    %278 = vmatpush.xpose.msra.mxu0 0.0
    %279 = vmatpush.xpose.msra.mxu0 0.0
    %280 = vmatpush.xpose.msra.mxu0 0.0
    %281 = vmatpush.xpose.msra.mxu0 0.0
    %282 = vmatpush.xpose.msra.mxu0 0.0
    %283 = vmatpush.xpose.msra.mxu0 0.0
    %284 = vmatpush.xpose.msra.mxu0 0.0
    %285 = vmatpush.xpose.msra.mxu0 0.0
    %286 = vmatpush.xpose.msra.mxu0 0.0
    %287 = vmatpush.xpose.msra.mxu0 0.0
    %288 = vmatpush.xpose.msra.mxu0 0.0
    %289 = vmatpush.xpose.msra.mxu0 0.0
    %290 = vmatpush.xpose.msra.mxu0 %v273
    %291 = vmatmul.f32.gmra.mxu0 %v271
    %v292 = vpop.f32.mrf.mxu0
    %v293 = vadd.f32 0.0, %v292
    %294 = vdwg.mxu0
    %295 = vrot.lane.b32.xlu0 %v215, 96
    %v296 = vpop.permute.xlu0 %295
    %v297 = vsel %vm218, %v215, 0
    %v299 = vsel %vm218, %v296, 0
    %301 = vmatpush.xpose.msra.mxu0 0.0
    %302 = vmatpush.xpose.msra.mxu0 0.0
    %303 = vmatpush.xpose.msra.mxu0 0.0
    %304 = vmatpush.xpose.msra.mxu0 0.0
    %305 = vmatpush.xpose.msra.mxu0 0.0
    %306 = vmatpush.xpose.msra.mxu0 0.0
    %307 = vmatpush.xpose.msra.mxu0 0.0
    %308 = vmatpush.xpose.msra.mxu0 0.0
    %309 = vmatpush.xpose.msra.mxu0 0.0
    %310 = vmatpush.xpose.msra.mxu0 0.0
    %311 = vmatpush.xpose.msra.mxu0 0.0
    %312 = vmatpush.xpose.msra.mxu0 0.0
    %313 = vmatpush.xpose.msra.mxu0 0.0
    %314 = vmatpush.xpose.msra.mxu0 0.0
    %315 = vmatpush.xpose.msra.mxu0 0.0
    %316 = vmatpush.xpose.msra.mxu0 %v299
    %317 = vmatmul.f32.gmra.mxu0 %v297
    %v318 = vpop.f32.mrf.mxu0
    %v319 = vadd.f32 0.0, %v318
    %320 = vdwg.mxu0
    %v321 = vsel %vm60, %v241, -1e+30
    %v322 = vsel %vm60, %v267, -1e+30
    %v323 = vsel %vm60, %v293, -1e+30
    %v324 = vsel %vm60, %v319, -1e+30
    %vm325 = vcmask 64512
    %v326 = vsel %vm325, %v321, -inf
    %327 = vmax.xlane.f32.xlu0 %v326
    %v328 = vpop.xlane.xlu0 %327
    %v329 = vsel %vm325, %v322, -inf
    %330 = vmax.xlane.f32.xlu0 %v329
    %v331 = vpop.xlane.xlu0 %330
    %v332 = vsel %vm325, %v323, -inf
    %333 = vmax.xlane.f32.xlu0 %v332
    %v334 = vpop.xlane.xlu0 %333
    %v335 = vsel %vm325, %v324, -inf
    %336 = vmax.xlane.f32.xlu0 %v335
    %v337 = vpop.xlane.xlu0 %336
    %v338 = vsub.f32 %v321, %v328
    %v339 = vsub.f32 %v322, %v331
    %v340 = vsub.f32 %v323, %v334
    %v341 = vsub.f32 %v324, %v337
    %v342 = vmul.f32 %v338, 1.442695
    %v343 = vpow.pop %v342
    %v344 = vmul.f32 %v339, 1.442695
    %v345 = vpow.pop %v344
    %v346 = vmul.f32 %v340, 1.442695
    %v347 = vpow.pop %v346
    %v348 = vmul.f32 %v341, 1.442695
    %v349 = vpow.pop %v348
    %v350 = vsel %vm325, %v343, 0.0
    %351 = vadd.xlane.f32.xlu0 %v350
    %v352 = vpop.xlane.xlu0 %351
    %v353 = vsel %vm325, %v345, 0.0
    %354 = vadd.xlane.f32.xlu0 %v353
    %v355 = vpop.xlane.xlu0 %354
    %v356 = vsel %vm325, %v347, 0.0
    %357 = vadd.xlane.f32.xlu0 %v356
    %v358 = vpop.xlane.xlu0 %357
    %v359 = vsel %vm325, %v349, 0.0
    %360 = vadd.xlane.f32.xlu0 %v359
    %v361 = vpop.xlane.xlu0 %360
    %v362 = vrcp.pop %v352
    %v363 = vmul.f32 %v352, %v362
    %v364 = vsub.f32 1.0, %v363
    %v365 = vmul.f32 %v362, %v364
    %v366 = vadd.f32 %v362, %v365
    %vm367 = vweird.f32 %v352
    %vm368 = vweird.f32 %v362
    %vm369 = vmor %vm367, %vm368
    %v370 = vsel %vm369, %v362, %v366
    %v371 = vand.u32 2147483647, %v352
    %vm372 = vcmp.eq.f32.partialorder %v371, 8.507059e+37
    %v373 = vand.u32 %v352, 2147483648
    %v374 = vor.u32 1.1754944e-38, %v373
    %v375 = vsel %vm372, %v374, %v370
    %v376 = vmul.f32 %v343, %v375
    %v377 = vrcp.pop %v355
    %v378 = vmul.f32 %v355, %v377
    %v379 = vsub.f32 1.0, %v378
    %v380 = vmul.f32 %v377, %v379
    %v381 = vadd.f32 %v377, %v380
    %vm382 = vweird.f32 %v355
    %vm383 = vweird.f32 %v377
    %vm384 = vmor %vm382, %vm383
    %v385 = vsel %vm384, %v377, %v381
    %v386 = vand.u32 2147483647, %v355
    %vm387 = vcmp.eq.f32.partialorder %v386, 8.507059e+37
    %v388 = vand.u32 %v355, 2147483648
    %v389 = vor.u32 1.1754944e-38, %v388
    %v390 = vsel %vm387, %v389, %v385
    %v391 = vmul.f32 %v345, %v390
    %v392 = vrcp.pop %v358
    %v393 = vmul.f32 %v358, %v392
    %v394 = vsub.f32 1.0, %v393
    %v395 = vmul.f32 %v392, %v394
    %v396 = vadd.f32 %v392, %v395
    %vm397 = vweird.f32 %v358
    %vm398 = vweird.f32 %v392
    %vm399 = vmor %vm397, %vm398
    %v400 = vsel %vm399, %v392, %v396
    %v401 = vand.u32 2147483647, %v358
    %vm402 = vcmp.eq.f32.partialorder %v401, 8.507059e+37
    %v403 = vand.u32 %v358, 2147483648
    %v404 = vor.u32 1.1754944e-38, %v403
    %v405 = vsel %vm402, %v404, %v400
    %v406 = vmul.f32 %v347, %v405
    %v407 = vrcp.pop %v361
    %v408 = vmul.f32 %v361, %v407
    %v409 = vsub.f32 1.0, %v408
    %v410 = vmul.f32 %v407, %v409
    %v411 = vadd.f32 %v407, %v410
    %vm412 = vweird.f32 %v361
    %vm413 = vweird.f32 %v407
    %vm414 = vmor %vm412, %vm413
    %v415 = vsel %vm414, %v407, %v411
    %v416 = vand.u32 2147483647, %v361
    %vm417 = vcmp.eq.f32.partialorder %v416, 8.507059e+37
    %v418 = vand.u32 %v361, 2147483648
    %v419 = vor.u32 1.1754944e-38, %v418
    %v420 = vsel %vm417, %v419, %v415
    %v421 = vmul.f32 %v349, %v420
    %422 = vrot.lane.b32.xlu0 %v208, 64
    %v423 = vpop.permute.xlu0 %422
    %v426 = vsel %vm325, %v376, 0
    %428 = vmatpush.msra.mxu0 0.0
    %429 = vmatpush.msra.mxu0 0.0
    %430 = vmatpush.msra.mxu0 0.0
    %431 = vmatpush.msra.mxu0 0.0
    %432 = vmatpush.msra.mxu0 0.0
    %433 = vmatpush.msra.mxu0 0.0
    %434 = vmatpush.msra.mxu0 0.0
    %435 = vmatpush.msra.mxu0 0.0
    %436 = vmatpush.msra.mxu0 0.0
    %437 = vmatpush.msra.mxu0 0.0
    %438 = vmatpush.msra.mxu0 0.0
    %439 = vmatpush.msra.mxu0 0.0
    %440 = vmatpush.msra.mxu0 0.0
    %441 = vmatpush.msra.mxu0 0.0
    %442 = vmatpush.msra.mxu0 0.0
    %443 = vmatpush.msra.mxu0 %v423
    %444 = vmatmul.f32.gmra.mxu0 %v426
    %v445 = vpop.f32.mrf.mxu0
    %v446 = vadd.f32 0.0, %v445
    %447 = vdwg.mxu0
    %448 = vrot.lane.b32.xlu0 %v209, 64
    %v449 = vpop.permute.xlu0 %448
    %v452 = vsel %vm325, %v391, 0
    %454 = vmatpush.msra.mxu0 0.0
    %455 = vmatpush.msra.mxu0 0.0
    %456 = vmatpush.msra.mxu0 0.0
    %457 = vmatpush.msra.mxu0 0.0
    %458 = vmatpush.msra.mxu0 0.0
    %459 = vmatpush.msra.mxu0 0.0
    %460 = vmatpush.msra.mxu0 0.0
    %461 = vmatpush.msra.mxu0 0.0
    %462 = vmatpush.msra.mxu0 0.0
    %463 = vmatpush.msra.mxu0 0.0
    %464 = vmatpush.msra.mxu0 0.0
    %465 = vmatpush.msra.mxu0 0.0
    %466 = vmatpush.msra.mxu0 0.0
    %467 = vmatpush.msra.mxu0 0.0
    %468 = vmatpush.msra.mxu0 0.0
    %469 = vmatpush.msra.mxu0 %v449
    %470 = vmatmul.f32.gmra.mxu0 %v452
    %v471 = vpop.f32.mrf.mxu0
    %v472 = vadd.f32 0.0, %v471
    %473 = vdwg.mxu0
    %474 = vrot.lane.b32.xlu0 %v213, 64
    %v475 = vpop.permute.xlu0 %474
    %v478 = vsel %vm325, %v406, 0
    %480 = vmatpush.msra.mxu0 0.0
    %481 = vmatpush.msra.mxu0 0.0
    %482 = vmatpush.msra.mxu0 0.0
    %483 = vmatpush.msra.mxu0 0.0
    %484 = vmatpush.msra.mxu0 0.0
    %485 = vmatpush.msra.mxu0 0.0
    %486 = vmatpush.msra.mxu0 0.0
    %487 = vmatpush.msra.mxu0 0.0
    %488 = vmatpush.msra.mxu0 0.0
    %489 = vmatpush.msra.mxu0 0.0
    %490 = vmatpush.msra.mxu0 0.0
    %491 = vmatpush.msra.mxu0 0.0
    %492 = vmatpush.msra.mxu0 0.0
    %493 = vmatpush.msra.mxu0 0.0
    %494 = vmatpush.msra.mxu0 0.0
    %495 = vmatpush.msra.mxu0 %v475
    %496 = vmatmul.f32.gmra.mxu0 %v478
    %v497 = vpop.f32.mrf.mxu0
    %v498 = vadd.f32 0.0, %v497
    %499 = vdwg.mxu0
    %500 = vrot.lane.b32.xlu0 %v215, 64
    %v501 = vpop.permute.xlu0 %500
    %v504 = vsel %vm325, %v421, 0
    %506 = vmatpush.msra.mxu0 0.0
    %507 = vmatpush.msra.mxu0 0.0
    %508 = vmatpush.msra.mxu0 0.0
    %509 = vmatpush.msra.mxu0 0.0
    %510 = vmatpush.msra.mxu0 0.0
    %511 = vmatpush.msra.mxu0 0.0
    %512 = vmatpush.msra.mxu0 0.0
    %513 = vmatpush.msra.mxu0 0.0
    %514 = vmatpush.msra.mxu0 0.0
    %515 = vmatpush.msra.mxu0 0.0
    %516 = vmatpush.msra.mxu0 0.0
    %517 = vmatpush.msra.mxu0 0.0
    %518 = vmatpush.msra.mxu0 0.0
    %519 = vmatpush.msra.mxu0 0.0
    %520 = vmatpush.msra.mxu0 0.0
    %521 = vmatpush.msra.mxu0 %v501
    %522 = vmatmul.f32.gmra.mxu0 %v504
    %v523 = vpop.f32.mrf.mxu0
    %v524 = vadd.f32 0.0, %v523
    %525 = vdwg.mxu0
    %528 = vrot.lane.b32.xlu0 %v498, 16
    %v529 = vpop.permute.xlu0 %528
    %530 = vrot.lane.b32.xlu0 %v524, 16
    %v531 = vpop.permute.xlu0 %530
    %v534 = vsel %vm218, %v446, %v529
    %v535 = vsel %vm218, %v472, %v531
    %v536 = vld [vmem:[#allocation2 + $0x20] sm:$0xff]
    %v537 = vld [vmem:[#allocation2 + $0x78] sm:$0xff]
    %v538 = vld [vmem:[#allocation2 + $0xd0] sm:$0xff]
    %v539 = vld [vmem:[#allocation2 + $0x128] sm:$0xff]
    %v541 = vsel %vm103, %v534, 0
    %v544 = vsel %vm103, %v535, 0
    %546 = vmatpush.msra.mxu0 0.0
    %547 = vmatpush.msra.mxu0 0.0
    %548 = vmatpush.msra.mxu0 0.0
    %549 = vmatpush.msra.mxu0 0.0
    %550 = vmatpush.msra.mxu0 0.0
    %551 = vmatpush.msra.mxu0 0.0
    %552 = vmatpush.msra.mxu0 0.0
    %553 = vmatpush.msra.mxu0 0.0
    %554 = vmatpush.msra.mxu0 0.0
    %555 = vmatpush.msra.mxu0 0.0
    %556 = vmatpush.msra.mxu0 0.0
    %557 = vmatpush.msra.mxu0 0.0
    %558 = vmatpush.msra.mxu0 %v539
    %559 = vmatpush.msra.mxu0 %v538
    %560 = vmatpush.msra.mxu0 %v537
    %561 = vmatpush.msra.mxu0 %v536
    %562 = vmatmul.f32.gmra.mxu0 %v541
    %v563 = vpop.f32.mrf.mxu0
    %v564 = vadd.f32 0.0, %v563
    %565 = vmatmul.f32.gmra.mxu0 %v544
    %v566 = vpop.f32.mrf.mxu0
    %v567 = vadd.f32 0.0, %v566
    %568 = vdwg.mxu0
    %v569 = vadd.f32 %v95, %v564
    %v570 = vadd.f32 %v98, %v567
    %v571 = vld [vmem:[%s4 + $0x5] sm:$0x1]
    %v572 = vperm.slane %v571, 0
    %v573 = vadd.f32 %v569, %v572
    %v574 = vadd.f32 %v570, %v572
    %v575 = vld [vmem:[%s4 + $0x6] sm:$0x1]
    %v576 = vmul.f32 %v573, %v573
    %v577 = vmul.f32 %v574, %v574
    %v578 = vsel %vm103, %v576, 0.0
    %579 = vadd.xlane.f32.xlu0 %v578
    %v580 = vpop.xlane.xlu0 %579
    %v581 = vsel %vm103, %v577, 0.0
    %582 = vadd.xlane.f32.xlu0 %v581
    %v583 = vpop.xlane.xlu0 %582
    %v584 = vmul.f32 %v580, %v116
    %v585 = vmul.f32 %v583, %v116
    %v586 = vadd.f32 %v584, 1.1920929e-07
    %v587 = vadd.f32 %v585, 1.1920929e-07
    %v588 = vrsqrt.pop %v586
    %v589 = vmul.f32 %v588, %v586
    %v590 = vmul.f32 %v589, %v588
    %v591 = vmul.f32 0.5, %v590
    %v592 = vsub.f32 1.5, %v591
    %v593 = vmul.f32 %v588, %v592
    %vm594 = vweird.f32 %v586
    %vm595 = vweird.f32 %v588
    %vm596 = vmor %vm594, %vm595
    %v597 = vsel %vm596, %v588, %v593
    %v598 = vrsqrt.pop %v587
    %v599 = vmul.f32 %v598, %v587
    %v600 = vmul.f32 %v599, %v598
    %v601 = vmul.f32 0.5, %v600
    %v602 = vsub.f32 1.5, %v601
    %v603 = vmul.f32 %v598, %v602
    %vm604 = vweird.f32 %v587
    %vm605 = vweird.f32 %v598
    %vm606 = vmor %vm604, %vm605
    %v607 = vsel %vm606, %v598, %v603
    %v608 = vmul.f32 %v573, %v597
    %v609 = vmul.f32 %v574, %v607
    %v610 = vperm.slane %v575, 0
    %v611 = vmul.f32 %v608, %v610
    %v612 = vmul.f32 %v609, %v610
    %v613 = vld [vmem:[#allocation2 + $0x28] sm:$0xff]
    %v614 = vld [vmem:[#allocation2 + $0x80] sm:$0xff]
    %v615 = vld [vmem:[#allocation2 + $0xd8] sm:$0xff]
    %v616 = vld [vmem:[#allocation2 + $0x130] sm:$0xff]
    %v617 = vld [vmem:[%s4 + $0x7] sm:$0x1]
    %v618 = vperm.slane %v617, 0
    %v620 = vsel %vm103, %v611, 0
    %v623 = vsel %vm103, %v612, 0
    %625 = vmatpush.msra.mxu0 0.0
    %626 = vmatpush.msra.mxu0 0.0
    %627 = vmatpush.msra.mxu0 0.0
    %628 = vmatpush.msra.mxu0 0.0
    %629 = vmatpush.msra.mxu0 0.0
    %630 = vmatpush.msra.mxu0 0.0
    %631 = vmatpush.msra.mxu0 0.0
    %632 = vmatpush.msra.mxu0 0.0
    %633 = vmatpush.msra.mxu0 0.0
    %634 = vmatpush.msra.mxu0 0.0
    %635 = vmatpush.msra.mxu0 0.0
    %636 = vmatpush.msra.mxu0 0.0
    %637 = vmatpush.msra.mxu0 %v616
    %638 = vmatpush.msra.mxu0 %v615
    %639 = vmatpush.msra.mxu0 %v614
    %640 = vmatpush.msra.mxu0 %v613
    %641 = vmatmul.f32.gmra.mxu0 %v620
    %v642 = vpop.f32.mrf.mxu0
    %v643 = vadd.f32 %v618, %v642
    %644 = vmatmul.f32.gmra.mxu0 %v623
    %v645 = vpop.f32.mrf.mxu0
    %v646 = vadd.f32 %v618, %v645
    %647 = vdwg.mxu0
    %v648 = vxor.u32 %v643, 2147483648
    %v649 = vxor.u32 %v646, 2147483648
    %v650 = vmul.f32 %v648, 1.442695
    %v651 = vpow.pop %v650
    %v652 = vmul.f32 %v649, 1.442695
    %v653 = vpow.pop %v652
    %v654 = vadd.f32 %v651, 1.0
    %v655 = vadd.f32 %v653, 1.0
    %v656 = vrcp.pop %v654
    %v657 = vmul.f32 %v654, %v656
    %v658 = vsub.f32 1.0, %v657
    %v659 = vmul.f32 %v656, %v658
    %v660 = vadd.f32 %v656, %v659
    %vm661 = vweird.f32 %v654
    %vm662 = vweird.f32 %v656
    %vm663 = vmor %vm661, %vm662
    %v664 = vsel %vm663, %v656, %v660
    %v665 = vand.u32 2147483647, %v654
    %vm666 = vcmp.eq.f32.partialorder %v665, 8.507059e+37
    %v667 = vand.u32 %v654, 2147483648
    %v668 = vor.u32 1.1754944e-38, %v667
    %v669 = vsel %vm666, %v668, %v664
    %v670 = vmul.f32 1.0, %v669
    %v671 = vrcp.pop %v655
    %v672 = vmul.f32 %v655, %v671
    %v673 = vsub.f32 1.0, %v672
    %v674 = vmul.f32 %v671, %v673
    %v675 = vadd.f32 %v671, %v674
    %vm676 = vweird.f32 %v655
    %vm677 = vweird.f32 %v671
    %vm678 = vmor %vm676, %vm677
    %v679 = vsel %vm678, %v671, %v675
    %v680 = vand.u32 2147483647, %v655
    %vm681 = vcmp.eq.f32.partialorder %v680, 8.507059e+37
    %v682 = vand.u32 %v655, 2147483648
    %v683 = vor.u32 1.1754944e-38, %v682
    %v684 = vsel %vm681, %v683, %v679
    %v685 = vmul.f32 1.0, %v684
    %v686 = vmul.f32 %v643, %v670
    %v687 = vmul.f32 %v646, %v685
    %690 = vrot.lane.b32.xlu0 %v643, 64
    %v691 = vpop.permute.xlu0 %690
    %692 = vrot.lane.b32.xlu0 %v646, 64
    %v693 = vpop.permute.xlu0 %692
    %v696 = vmul.f32 %v686, %v691
    %v697 = vmul.f32 %v687, %v693
    %v698 = vld [vmem:[#allocation2 + $0x30] sm:$0xff]
    %v699 = vld [vmem:[#allocation2 + $0x88] sm:$0xff]
    %v700 = vld [vmem:[#allocation2 + $0xe0] sm:$0xff]
    %v701 = vld [vmem:[#allocation2 + $0x138] sm:$0xff]
    %v702 = vld [vmem:[#allocation2 + $0x190] sm:$0xff]
    %v703 = vld [vmem:[#allocation2 + $0x1e8] sm:$0xff]
    %v704 = vld [vmem:[#allocation2 + $0x240] sm:$0xff]
    %v705 = vld [vmem:[#allocation2 + $0x298] sm:$0xff]
    %vm706 = vcmask 523264
    %v708 = vsel %vm706, %v696, 0
    %v711 = vsel %vm706, %v697, 0
    %713 = vmatpush.msra.mxu0 0.0
    %714 = vmatpush.msra.mxu0 0.0
    %715 = vmatpush.msra.mxu0 0.0
    %716 = vmatpush.msra.mxu0 0.0
    %717 = vmatpush.msra.mxu0 0.0
    %718 = vmatpush.msra.mxu0 0.0
    %719 = vmatpush.msra.mxu0 0.0
    %720 = vmatpush.msra.mxu0 0.0
    %721 = vmatpush.msra.mxu0 %v705
    %722 = vmatpush.msra.mxu0 %v704
    %723 = vmatpush.msra.mxu0 %v703
    %724 = vmatpush.msra.mxu0 %v702
    %725 = vmatpush.msra.mxu0 %v701
    %726 = vmatpush.msra.mxu0 %v700
    %727 = vmatpush.msra.mxu0 %v699
    %728 = vmatpush.msra.mxu0 %v698
    %729 = vmatmul.f32.gmra.mxu0 %v708
    %v730 = vpop.f32.mrf.mxu0
    %v731 = vadd.f32 0.0, %v730
    %732 = vmatmul.f32.gmra.mxu0 %v711
    %v733 = vpop.f32.mrf.mxu0
    %v734 = vadd.f32 0.0, %v733
    %735 = vdwg.mxu0
    %v736 = vadd.f32 %v573, %v731
    %v737 = vadd.f32 %v574, %v734
    %v738 = vld [vmem:[%s4 + $0x8] sm:$0x1]
    %v739 = vperm.slane %v738, 0
    %v740 = vadd.f32 %v736, %v739
    %v741 = vadd.f32 %v737, %v739
    %v742 = vld [vmem:[%s4 + $0x9] sm:$0x1]
    %v743 = vmul.f32 %v740, %v740
    %v744 = vmul.f32 %v741, %v741
    %v745 = vsel %vm103, %v743, 0.0
    %746 = vadd.xlane.f32.xlu0 %v745
    %v747 = vpop.xlane.xlu0 %746
    %v748 = vsel %vm103, %v744, 0.0
    %749 = vadd.xlane.f32.xlu0 %v748
    %v750 = vpop.xlane.xlu0 %749
    %v751 = vmul.f32 %v747, %v116
    %v752 = vmul.f32 %v750, %v116
    %v753 = vadd.f32 %v751, 1.1920929e-07
    %v754 = vadd.f32 %v752, 1.1920929e-07
    %v755 = vrsqrt.pop %v753
    %v756 = vmul.f32 %v755, %v753
    %v757 = vmul.f32 %v756, %v755
    %v758 = vmul.f32 0.5, %v757
    %v759 = vsub.f32 1.5, %v758
    %v760 = vmul.f32 %v755, %v759
    %vm761 = vweird.f32 %v753
    %vm762 = vweird.f32 %v755
    %vm763 = vmor %vm761, %vm762
    %v764 = vsel %vm763, %v755, %v760
    %v765 = vrsqrt.pop %v754
    %v766 = vmul.f32 %v765, %v754
    %v767 = vmul.f32 %v766, %v765
    %v768 = vmul.f32 0.5, %v767
    %v769 = vsub.f32 1.5, %v768
    %v770 = vmul.f32 %v765, %v769
    %vm771 = vweird.f32 %v754
    %vm772 = vweird.f32 %v765
    %vm773 = vmor %vm771, %vm772
    %v774 = vsel %vm773, %v765, %v770
    %v775 = vmul.f32 %v740, %v764
    %v776 = vmul.f32 %v741, %v774
    %v777 = vperm.slane %v742, 0
    %v778 = vmul.f32 %v775, %v777
    %v779 = vmul.f32 %v776, %v777
    %v780 = vld [vmem:[#allocation2 + $0x38] sm:$0xff]
    %v781 = vld [vmem:[#allocation2 + $0x90] sm:$0xff]
    %v782 = vld [vmem:[#allocation2 + $0xe8] sm:$0xff]
    %v783 = vld [vmem:[#allocation2 + $0x140] sm:$0xff]
    %v784 = vld [vmem:[%s4 + $0xa] sm:$0x1]
    %v785 = vperm.slane %v784, 0
    %v787 = vsel %vm103, %v778, 0
    %v790 = vsel %vm103, %v779, 0
    %792 = vmatpush.msra.mxu0 0.0
    %793 = vmatpush.msra.mxu0 0.0
    %794 = vmatpush.msra.mxu0 0.0
    %795 = vmatpush.msra.mxu0 0.0
    %796 = vmatpush.msra.mxu0 0.0
    %797 = vmatpush.msra.mxu0 0.0
    %798 = vmatpush.msra.mxu0 0.0
    %799 = vmatpush.msra.mxu0 0.0
    %800 = vmatpush.msra.mxu0 0.0
    %801 = vmatpush.msra.mxu0 0.0
    %802 = vmatpush.msra.mxu0 0.0
    %803 = vmatpush.msra.mxu0 0.0
    %804 = vmatpush.msra.mxu0 %v783
    %805 = vmatpush.msra.mxu0 %v782
    %806 = vmatpush.msra.mxu0 %v781
    %807 = vmatpush.msra.mxu0 %v780
    %808 = vmatmul.f32.gmra.mxu0 %v787
    %v809 = vpop.f32.mrf.mxu0
    %v810 = vadd.f32 %v785, %v809
    %811 = vmatmul.f32.gmra.mxu0 %v790
    %v812 = vpop.f32.mrf.mxu0
    %v813 = vadd.f32 %v785, %v812
    %814 = vdwg.mxu0
    %v815 = vmul.f32 %v810, %v36
    %v816 = vmul.f32 %v813, %v37
    %817 = vmatpush.msra.mxu0 %v55
    %818 = vmatpush.msra.mxu0 %v54
    %819 = vmatpush.msra.mxu0 %v53
    %820 = vmatpush.msra.mxu0 %v52
    %821 = vmatpush.msra.mxu0 %v51
    %822 = vmatpush.msra.mxu0 %v50
    %823 = vmatpush.msra.mxu0 %v49
    %824 = vmatpush.msra.mxu0 %v48
    %825 = vmatpush.msra.mxu0 %v47
    %826 = vmatpush.msra.mxu0 %v46
    %827 = vmatpush.msra.mxu0 %v45
    %828 = vmatpush.msra.mxu0 %v44
    %829 = vmatpush.msra.mxu0 %v43
    %830 = vmatpush.msra.mxu0 %v42
    %831 = vmatpush.msra.mxu0 %v41
    %832 = vmatpush.msra.mxu0 %v40
    %833 = vmatmul.f32.gmra.mxu0 %v810
    %v834 = vpop.f32.mrf.mxu0
    %v835 = vadd.f32 0.0, %v834
    %836 = vmatmul.f32.gmra.mxu0 %v813
    %v837 = vpop.f32.mrf.mxu0
    %v838 = vadd.f32 0.0, %v837
    %839 = vdwg.mxu0
    %v840 = vmul.f32 %v835, %v38
    %v841 = vmul.f32 %v838, %v39
    %v842 = vadd.f32 %v815, %v840
    %v843 = vadd.f32 %v816, %v841
    %846 = vrot.lane.b32.xlu0 %v842, 112
    %v847 = vpop.permute.xlu0 %846
    %848 = vrot.lane.b32.xlu0 %v843, 112
    %v849 = vpop.permute.xlu0 %848
    %850 = vrot.lane.b32.xlu0 %v842, 96
    %v851 = vpop.permute.xlu0 %850
    %v852 = vsel %vm218, %v842, 0
    %v854 = vsel %vm218, %v851, 0
    %856 = vmatpush.xpose.msra.mxu0 0.0
    %857 = vmatpush.xpose.msra.mxu0 0.0
    %858 = vmatpush.xpose.msra.mxu0 0.0
    %859 = vmatpush.xpose.msra.mxu0 0.0
    %860 = vmatpush.xpose.msra.mxu0 0.0
    %861 = vmatpush.xpose.msra.mxu0 0.0
    %862 = vmatpush.xpose.msra.mxu0 0.0
    %863 = vmatpush.xpose.msra.mxu0 0.0
    %864 = vmatpush.xpose.msra.mxu0 0.0
    %865 = vmatpush.xpose.msra.mxu0 0.0
    %866 = vmatpush.xpose.msra.mxu0 0.0
    %867 = vmatpush.xpose.msra.mxu0 0.0
    %868 = vmatpush.xpose.msra.mxu0 0.0
    %869 = vmatpush.xpose.msra.mxu0 0.0
    %870 = vmatpush.xpose.msra.mxu0 0.0
    %871 = vmatpush.xpose.msra.mxu0 %v854
    %872 = vmatmul.f32.gmra.mxu0 %v852
    %v873 = vpop.f32.mrf.mxu0
    %v874 = vadd.f32 0.0, %v873
    %875 = vdwg.mxu0
    %876 = vrot.lane.b32.xlu0 %v843, 96
    %v877 = vpop.permute.xlu0 %876
    %v878 = vsel %vm218, %v843, 0
    %v880 = vsel %vm218, %v877, 0
    %882 = vmatpush.xpose.msra.mxu0 0.0
    %883 = vmatpush.xpose.msra.mxu0 0.0
    %884 = vmatpush.xpose.msra.mxu0 0.0
    %885 = vmatpush.xpose.msra.mxu0 0.0
    %886 = vmatpush.xpose.msra.mxu0 0.0
    %887 = vmatpush.xpose.msra.mxu0 0.0
    %888 = vmatpush.xpose.msra.mxu0 0.0
    %889 = vmatpush.xpose.msra.mxu0 0.0
    %890 = vmatpush.xpose.msra.mxu0 0.0
    %891 = vmatpush.xpose.msra.mxu0 0.0
    %892 = vmatpush.xpose.msra.mxu0 0.0
    %893 = vmatpush.xpose.msra.mxu0 0.0
    %894 = vmatpush.xpose.msra.mxu0 0.0
    %895 = vmatpush.xpose.msra.mxu0 0.0
    %896 = vmatpush.xpose.msra.mxu0 0.0
    %897 = vmatpush.xpose.msra.mxu0 %v880
    %898 = vmatmul.f32.gmra.mxu0 %v878
    %v899 = vpop.f32.mrf.mxu0
    %v900 = vadd.f32 0.0, %v899
    %901 = vdwg.mxu0
    %902 = vrot.lane.b32.xlu0 %v847, 96
    %v903 = vpop.permute.xlu0 %902
    %v904 = vsel %vm218, %v847, 0
    %v906 = vsel %vm218, %v903, 0
    %908 = vmatpush.xpose.msra.mxu0 0.0
    %909 = vmatpush.xpose.msra.mxu0 0.0
    %910 = vmatpush.xpose.msra.mxu0 0.0
    %911 = vmatpush.xpose.msra.mxu0 0.0
    %912 = vmatpush.xpose.msra.mxu0 0.0
    %913 = vmatpush.xpose.msra.mxu0 0.0
    %914 = vmatpush.xpose.msra.mxu0 0.0
    %915 = vmatpush.xpose.msra.mxu0 0.0
    %916 = vmatpush.xpose.msra.mxu0 0.0
    %917 = vmatpush.xpose.msra.mxu0 0.0
    %918 = vmatpush.xpose.msra.mxu0 0.0
    %919 = vmatpush.xpose.msra.mxu0 0.0
    %920 = vmatpush.xpose.msra.mxu0 0.0
    %921 = vmatpush.xpose.msra.mxu0 0.0
    %922 = vmatpush.xpose.msra.mxu0 0.0
    %923 = vmatpush.xpose.msra.mxu0 %v906
    %924 = vmatmul.f32.gmra.mxu0 %v904
    %v925 = vpop.f32.mrf.mxu0
    %v926 = vadd.f32 0.0, %v925
    %927 = vdwg.mxu0
    %928 = vrot.lane.b32.xlu0 %v849, 96
    %v929 = vpop.permute.xlu0 %928
    %v930 = vsel %vm218, %v849, 0
    %v932 = vsel %vm218, %v929, 0
    %934 = vmatpush.xpose.msra.mxu0 0.0
    %935 = vmatpush.xpose.msra.mxu0 0.0
    %936 = vmatpush.xpose.msra.mxu0 0.0
    %937 = vmatpush.xpose.msra.mxu0 0.0
    %938 = vmatpush.xpose.msra.mxu0 0.0
    %939 = vmatpush.xpose.msra.mxu0 0.0
    %940 = vmatpush.xpose.msra.mxu0 0.0
    %941 = vmatpush.xpose.msra.mxu0 0.0
    %942 = vmatpush.xpose.msra.mxu0 0.0
    %943 = vmatpush.xpose.msra.mxu0 0.0
    %944 = vmatpush.xpose.msra.mxu0 0.0
    %945 = vmatpush.xpose.msra.mxu0 0.0
    %946 = vmatpush.xpose.msra.mxu0 0.0
    %947 = vmatpush.xpose.msra.mxu0 0.0
    %948 = vmatpush.xpose.msra.mxu0 0.0
    %949 = vmatpush.xpose.msra.mxu0 %v932
    %950 = vmatmul.f32.gmra.mxu0 %v930
    %v951 = vpop.f32.mrf.mxu0
    %v952 = vadd.f32 0.0, %v951
    %953 = vdwg.mxu0
    %v954 = vsel %vm60, %v874, -1e+30
    %v955 = vsel %vm60, %v900, -1e+30
    %v956 = vsel %vm60, %v926, -1e+30
    %v957 = vsel %vm60, %v952, -1e+30
    %v958 = vsel %vm325, %v954, -inf
    %959 = vmax.xlane.f32.xlu0 %v958
    %v960 = vpop.xlane.xlu0 %959
    %v961 = vsel %vm325, %v955, -inf
    %962 = vmax.xlane.f32.xlu0 %v961
    %v963 = vpop.xlane.xlu0 %962
    %v964 = vsel %vm325, %v956, -inf
    %965 = vmax.xlane.f32.xlu0 %v964
    %v966 = vpop.xlane.xlu0 %965
    %v967 = vsel %vm325, %v957, -inf
    %968 = vmax.xlane.f32.xlu0 %v967
    %v969 = vpop.xlane.xlu0 %968
    %v970 = vsub.f32 %v954, %v960
    %v971 = vsub.f32 %v955, %v963
    %v972 = vsub.f32 %v956, %v966
    %v973 = vsub.f32 %v957, %v969
    %v974 = vmul.f32 %v970, 1.442695
    %v975 = vpow.pop %v974
    %v976 = vmul.f32 %v971, 1.442695
    %v977 = vpow.pop %v976
    %v978 = vmul.f32 %v972, 1.442695
    %v979 = vpow.pop %v978
    %v980 = vmul.f32 %v973, 1.442695
    %v981 = vpow.pop %v980
    %v982 = vsel %vm325, %v975, 0.0
    %983 = vadd.xlane.f32.xlu0 %v982
    %v984 = vpop.xlane.xlu0 %983
    %v985 = vsel %vm325, %v977, 0.0
    %986 = vadd.xlane.f32.xlu0 %v985
    %v987 = vpop.xlane.xlu0 %986
    %v988 = vsel %vm325, %v979, 0.0
    %989 = vadd.xlane.f32.xlu0 %v988
    %v990 = vpop.xlane.xlu0 %989
    %v991 = vsel %vm325, %v981, 0.0
    %992 = vadd.xlane.f32.xlu0 %v991
    %v993 = vpop.xlane.xlu0 %992
    %v994 = vrcp.pop %v984
    %v995 = vmul.f32 %v984, %v994
    %v996 = vsub.f32 1.0, %v995
    %v997 = vmul.f32 %v994, %v996
    %v998 = vadd.f32 %v994, %v997
    %vm999 = vweird.f32 %v984
    %vm1000 = vweird.f32 %v994
    %vm1001 = vmor %vm999, %vm1000
    %v1002 = vsel %vm1001, %v994, %v998
    %v1003 = vand.u32 2147483647, %v984
    %vm1004 = vcmp.eq.f32.partialorder %v1003, 8.507059e+37
    %v1005 = vand.u32 %v984, 2147483648
    %v1006 = vor.u32 1.1754944e-38, %v1005
    %v1007 = vsel %vm1004, %v1006, %v1002
    %v1008 = vmul.f32 %v975, %v1007
    %v1009 = vrcp.pop %v987
    %v1010 = vmul.f32 %v987, %v1009
    %v1011 = vsub.f32 1.0, %v1010
    %v1012 = vmul.f32 %v1009, %v1011
    %v1013 = vadd.f32 %v1009, %v1012
    %vm1014 = vweird.f32 %v987
    %vm1015 = vweird.f32 %v1009
    %vm1016 = vmor %vm1014, %vm1015
    %v1017 = vsel %vm1016, %v1009, %v1013
    %v1018 = vand.u32 2147483647, %v987
    %vm1019 = vcmp.eq.f32.partialorder %v1018, 8.507059e+37
    %v1020 = vand.u32 %v987, 2147483648
    %v1021 = vor.u32 1.1754944e-38, %v1020
    %v1022 = vsel %vm1019, %v1021, %v1017
    %v1023 = vmul.f32 %v977, %v1022
    %v1024 = vrcp.pop %v990
    %v1025 = vmul.f32 %v990, %v1024
    %v1026 = vsub.f32 1.0, %v1025
    %v1027 = vmul.f32 %v1024, %v1026
    %v1028 = vadd.f32 %v1024, %v1027
    %vm1029 = vweird.f32 %v990
    %vm1030 = vweird.f32 %v1024
    %vm1031 = vmor %vm1029, %vm1030
    %v1032 = vsel %vm1031, %v1024, %v1028
    %v1033 = vand.u32 2147483647, %v990
    %vm1034 = vcmp.eq.f32.partialorder %v1033, 8.507059e+37
    %v1035 = vand.u32 %v990, 2147483648
    %v1036 = vor.u32 1.1754944e-38, %v1035
    %v1037 = vsel %vm1034, %v1036, %v1032
    %v1038 = vmul.f32 %v979, %v1037
    %v1039 = vrcp.pop %v993
    %v1040 = vmul.f32 %v993, %v1039
    %v1041 = vsub.f32 1.0, %v1040
    %v1042 = vmul.f32 %v1039, %v1041
    %v1043 = vadd.f32 %v1039, %v1042
    %vm1044 = vweird.f32 %v993
    %vm1045 = vweird.f32 %v1039
    %vm1046 = vmor %vm1044, %vm1045
    %v1047 = vsel %vm1046, %v1039, %v1043
    %v1048 = vand.u32 2147483647, %v993
    %vm1049 = vcmp.eq.f32.partialorder %v1048, 8.507059e+37
    %v1050 = vand.u32 %v993, 2147483648
    %v1051 = vor.u32 1.1754944e-38, %v1050
    %v1052 = vsel %vm1049, %v1051, %v1047
    %v1053 = vmul.f32 %v981, %v1052
    %1054 = vrot.lane.b32.xlu0 %v842, 64
    %v1055 = vpop.permute.xlu0 %1054
    %v1058 = vsel %vm325, %v1008, 0
    %1060 = vmatpush.msra.mxu0 0.0
    %1061 = vmatpush.msra.mxu0 0.0
    %1062 = vmatpush.msra.mxu0 0.0
    %1063 = vmatpush.msra.mxu0 0.0
    %1064 = vmatpush.msra.mxu0 0.0
    %1065 = vmatpush.msra.mxu0 0.0
    %1066 = vmatpush.msra.mxu0 0.0
    %1067 = vmatpush.msra.mxu0 0.0
    %1068 = vmatpush.msra.mxu0 0.0
    %1069 = vmatpush.msra.mxu0 0.0
    %1070 = vmatpush.msra.mxu0 0.0
    %1071 = vmatpush.msra.mxu0 0.0
    %1072 = vmatpush.msra.mxu0 0.0
    %1073 = vmatpush.msra.mxu0 0.0
    %1074 = vmatpush.msra.mxu0 0.0
    %1075 = vmatpush.msra.mxu0 %v1055
    %1076 = vmatmul.f32.gmra.mxu0 %v1058
    %v1077 = vpop.f32.mrf.mxu0
    %v1078 = vadd.f32 0.0, %v1077
    %1079 = vdwg.mxu0
    %1080 = vrot.lane.b32.xlu0 %v843, 64
    %v1081 = vpop.permute.xlu0 %1080
    %v1084 = vsel %vm325, %v1023, 0
    %1086 = vmatpush.msra.mxu0 0.0
    %1087 = vmatpush.msra.mxu0 0.0
    %1088 = vmatpush.msra.mxu0 0.0
    %1089 = vmatpush.msra.mxu0 0.0
    %1090 = vmatpush.msra.mxu0 0.0
    %1091 = vmatpush.msra.mxu0 0.0
    %1092 = vmatpush.msra.mxu0 0.0
    %1093 = vmatpush.msra.mxu0 0.0
    %1094 = vmatpush.msra.mxu0 0.0
    %1095 = vmatpush.msra.mxu0 0.0
    %1096 = vmatpush.msra.mxu0 0.0
    %1097 = vmatpush.msra.mxu0 0.0
    %1098 = vmatpush.msra.mxu0 0.0
    %1099 = vmatpush.msra.mxu0 0.0
    %1100 = vmatpush.msra.mxu0 0.0
    %1101 = vmatpush.msra.mxu0 %v1081
    %1102 = vmatmul.f32.gmra.mxu0 %v1084
    %v1103 = vpop.f32.mrf.mxu0
    %v1104 = vadd.f32 0.0, %v1103
    %1105 = vdwg.mxu0
    %1106 = vrot.lane.b32.xlu0 %v847, 64
    %v1107 = vpop.permute.xlu0 %1106
    %v1110 = vsel %vm325, %v1038, 0
    %1112 = vmatpush.msra.mxu0 0.0
    %1113 = vmatpush.msra.mxu0 0.0
    %1114 = vmatpush.msra.mxu0 0.0
    %1115 = vmatpush.msra.mxu0 0.0
    %1116 = vmatpush.msra.mxu0 0.0
    %1117 = vmatpush.msra.mxu0 0.0
    %1118 = vmatpush.msra.mxu0 0.0
    %1119 = vmatpush.msra.mxu0 0.0
    %1120 = vmatpush.msra.mxu0 0.0
    %1121 = vmatpush.msra.mxu0 0.0
    %1122 = vmatpush.msra.mxu0 0.0
    %1123 = vmatpush.msra.mxu0 0.0
    %1124 = vmatpush.msra.mxu0 0.0
    %1125 = vmatpush.msra.mxu0 0.0
    %1126 = vmatpush.msra.mxu0 0.0
    %1127 = vmatpush.msra.mxu0 %v1107
    %1128 = vmatmul.f32.gmra.mxu0 %v1110
    %v1129 = vpop.f32.mrf.mxu0
    %v1130 = vadd.f32 0.0, %v1129
    %1131 = vdwg.mxu0
    %1132 = vrot.lane.b32.xlu0 %v849, 64
    %v1133 = vpop.permute.xlu0 %1132
    %v1136 = vsel %vm325, %v1053, 0
    %1138 = vmatpush.msra.mxu0 0.0
    %1139 = vmatpush.msra.mxu0 0.0
    %1140 = vmatpush.msra.mxu0 0.0
    %1141 = vmatpush.msra.mxu0 0.0
    %1142 = vmatpush.msra.mxu0 0.0
    %1143 = vmatpush.msra.mxu0 0.0
    %1144 = vmatpush.msra.mxu0 0.0
    %1145 = vmatpush.msra.mxu0 0.0
    %1146 = vmatpush.msra.mxu0 0.0
    %1147 = vmatpush.msra.mxu0 0.0
    %1148 = vmatpush.msra.mxu0 0.0
    %1149 = vmatpush.msra.mxu0 0.0
    %1150 = vmatpush.msra.mxu0 0.0
    %1151 = vmatpush.msra.mxu0 0.0
    %1152 = vmatpush.msra.mxu0 0.0
    %1153 = vmatpush.msra.mxu0 %v1133
    %1154 = vmatmul.f32.gmra.mxu0 %v1136
    %v1155 = vpop.f32.mrf.mxu0
    %v1156 = vadd.f32 0.0, %v1155
    %1157 = vdwg.mxu0
    %1160 = vrot.lane.b32.xlu0 %v1130, 16
    %v1161 = vpop.permute.xlu0 %1160
    %1162 = vrot.lane.b32.xlu0 %v1156, 16
    %v1163 = vpop.permute.xlu0 %1162
    %v1166 = vsel %vm218, %v1078, %v1161
    %v1167 = vsel %vm218, %v1104, %v1163
    %v1168 = vld [vmem:[#allocation2 + $0x40] sm:$0xff]
    %v1169 = vld [vmem:[#allocation2 + $0x98] sm:$0xff]
    %v1170 = vld [vmem:[#allocation2 + $0xf0] sm:$0xff]
    %v1171 = vld [vmem:[#allocation2 + $0x148] sm:$0xff]
    %v1173 = vsel %vm103, %v1166, 0
    %v1176 = vsel %vm103, %v1167, 0
    %1178 = vmatpush.msra.mxu0 0.0
    %1179 = vmatpush.msra.mxu0 0.0
    %1180 = vmatpush.msra.mxu0 0.0
    %1181 = vmatpush.msra.mxu0 0.0
    %1182 = vmatpush.msra.mxu0 0.0
    %1183 = vmatpush.msra.mxu0 0.0
    %1184 = vmatpush.msra.mxu0 0.0
    %1185 = vmatpush.msra.mxu0 0.0
    %1186 = vmatpush.msra.mxu0 0.0
    %1187 = vmatpush.msra.mxu0 0.0
    %1188 = vmatpush.msra.mxu0 0.0
    %1189 = vmatpush.msra.mxu0 0.0
    %1190 = vmatpush.msra.mxu0 %v1171
    %1191 = vmatpush.msra.mxu0 %v1170
    %1192 = vmatpush.msra.mxu0 %v1169
    %1193 = vmatpush.msra.mxu0 %v1168
    %1194 = vmatmul.f32.gmra.mxu0 %v1173
    %v1195 = vpop.f32.mrf.mxu0
    %v1196 = vadd.f32 0.0, %v1195
    %1197 = vmatmul.f32.gmra.mxu0 %v1176
    %v1198 = vpop.f32.mrf.mxu0
    %v1199 = vadd.f32 0.0, %v1198
    %1200 = vdwg.mxu0
    %v1201 = vadd.f32 %v740, %v1196
    %v1202 = vadd.f32 %v741, %v1199
    %v1203 = vld [vmem:[%s4 + $0xb] sm:$0x1]
    %v1204 = vperm.slane %v1203, 0
    %v1205 = vadd.f32 %v1201, %v1204
    %v1206 = vadd.f32 %v1202, %v1204
    %v1207 = vld [vmem:[%s4 + $0xc] sm:$0x1]
    %v1208 = vmul.f32 %v1205, %v1205
    %v1209 = vmul.f32 %v1206, %v1206
    %v1210 = vsel %vm103, %v1208, 0.0
    %1211 = vadd.xlane.f32.xlu0 %v1210
    %v1212 = vpop.xlane.xlu0 %1211
    %v1213 = vsel %vm103, %v1209, 0.0
    %1214 = vadd.xlane.f32.xlu0 %v1213
    %v1215 = vpop.xlane.xlu0 %1214
    %v1216 = vmul.f32 %v1212, %v116
    %v1217 = vmul.f32 %v1215, %v116
    %v1218 = vadd.f32 %v1216, 1.1920929e-07
    %v1219 = vadd.f32 %v1217, 1.1920929e-07
    %v1220 = vrsqrt.pop %v1218
    %v1221 = vmul.f32 %v1220, %v1218
    %v1222 = vmul.f32 %v1221, %v1220
    %v1223 = vmul.f32 0.5, %v1222
    %v1224 = vsub.f32 1.5, %v1223
    %v1225 = vmul.f32 %v1220, %v1224
    %vm1226 = vweird.f32 %v1218
    %vm1227 = vweird.f32 %v1220
    %vm1228 = vmor %vm1226, %vm1227
    %v1229 = vsel %vm1228, %v1220, %v1225
    %v1230 = vrsqrt.pop %v1219
    %v1231 = vmul.f32 %v1230, %v1219
    %v1232 = vmul.f32 %v1231, %v1230
    %v1233 = vmul.f32 0.5, %v1232
    %v1234 = vsub.f32 1.5, %v1233
    %v1235 = vmul.f32 %v1230, %v1234
    %vm1236 = vweird.f32 %v1219
    %vm1237 = vweird.f32 %v1230
    %vm1238 = vmor %vm1236, %vm1237
    %v1239 = vsel %vm1238, %v1230, %v1235
    %v1240 = vmul.f32 %v1205, %v1229
    %v1241 = vmul.f32 %v1206, %v1239
    %v1242 = vperm.slane %v1207, 0
    %v1243 = vmul.f32 %v1240, %v1242
    %v1244 = vmul.f32 %v1241, %v1242
    %v1245 = vld [vmem:[#allocation2 + $0x48] sm:$0xff]
    %v1246 = vld [vmem:[#allocation2 + $0xa0] sm:$0xff]
    %v1247 = vld [vmem:[#allocation2 + $0xf8] sm:$0xff]
    %v1248 = vld [vmem:[#allocation2 + $0x150] sm:$0xff]
    %v1249 = vld [vmem:[%s4 + $0xd] sm:$0x1]
    %v1250 = vperm.slane %v1249, 0
    %v1252 = vsel %vm103, %v1243, 0
    %v1255 = vsel %vm103, %v1244, 0
    %1257 = vmatpush.msra.mxu0 0.0
    %1258 = vmatpush.msra.mxu0 0.0
    %1259 = vmatpush.msra.mxu0 0.0
    %1260 = vmatpush.msra.mxu0 0.0
    %1261 = vmatpush.msra.mxu0 0.0
    %1262 = vmatpush.msra.mxu0 0.0
    %1263 = vmatpush.msra.mxu0 0.0
    %1264 = vmatpush.msra.mxu0 0.0
    %1265 = vmatpush.msra.mxu0 0.0
    %1266 = vmatpush.msra.mxu0 0.0
    %1267 = vmatpush.msra.mxu0 0.0
    %1268 = vmatpush.msra.mxu0 0.0
    %1269 = vmatpush.msra.mxu0 %v1248
    %1270 = vmatpush.msra.mxu0 %v1247
    %1271 = vmatpush.msra.mxu0 %v1246
    %1272 = vmatpush.msra.mxu0 %v1245
    %1273 = vmatmul.f32.gmra.mxu0 %v1252
    %v1274 = vpop.f32.mrf.mxu0
    %v1275 = vadd.f32 %v1250, %v1274
    %1276 = vmatmul.f32.gmra.mxu0 %v1255
    %v1277 = vpop.f32.mrf.mxu0
    %v1278 = vadd.f32 %v1250, %v1277
    %1279 = vdwg.mxu0
    %v1280 = vxor.u32 %v1275, 2147483648
    %v1281 = vxor.u32 %v1278, 2147483648
    %v1282 = vmul.f32 %v1280, 1.442695
    %v1283 = vpow.pop %v1282
    %v1284 = vmul.f32 %v1281, 1.442695
    %v1285 = vpow.pop %v1284
    %v1286 = vadd.f32 %v1283, 1.0
    %v1287 = vadd.f32 %v1285, 1.0
    %v1288 = vrcp.pop %v1286
    %v1289 = vmul.f32 %v1286, %v1288
    %v1290 = vsub.f32 1.0, %v1289
    %v1291 = vmul.f32 %v1288, %v1290
    %v1292 = vadd.f32 %v1288, %v1291
    %vm1293 = vweird.f32 %v1286
    %vm1294 = vweird.f32 %v1288
    %vm1295 = vmor %vm1293, %vm1294
    %v1296 = vsel %vm1295, %v1288, %v1292
    %v1297 = vand.u32 2147483647, %v1286
    %vm1298 = vcmp.eq.f32.partialorder %v1297, 8.507059e+37
    %v1299 = vand.u32 %v1286, 2147483648
    %v1300 = vor.u32 1.1754944e-38, %v1299
    %v1301 = vsel %vm1298, %v1300, %v1296
    %v1302 = vmul.f32 1.0, %v1301
    %v1303 = vrcp.pop %v1287
    %v1304 = vmul.f32 %v1287, %v1303
    %v1305 = vsub.f32 1.0, %v1304
    %v1306 = vmul.f32 %v1303, %v1305
    %v1307 = vadd.f32 %v1303, %v1306
    %vm1308 = vweird.f32 %v1287
    %vm1309 = vweird.f32 %v1303
    %vm1310 = vmor %vm1308, %vm1309
    %v1311 = vsel %vm1310, %v1303, %v1307
    %v1312 = vand.u32 2147483647, %v1287
    %vm1313 = vcmp.eq.f32.partialorder %v1312, 8.507059e+37
    %v1314 = vand.u32 %v1287, 2147483648
    %v1315 = vor.u32 1.1754944e-38, %v1314
    %v1316 = vsel %vm1313, %v1315, %v1311
    %v1317 = vmul.f32 1.0, %v1316
    %v1318 = vmul.f32 %v1275, %v1302
    %v1319 = vmul.f32 %v1278, %v1317
    %1322 = vrot.lane.b32.xlu0 %v1275, 64
    %v1323 = vpop.permute.xlu0 %1322
    %1324 = vrot.lane.b32.xlu0 %v1278, 64
    %v1325 = vpop.permute.xlu0 %1324
    %v1328 = vmul.f32 %v1318, %v1323
    %v1329 = vmul.f32 %v1319, %v1325
    %v1330 = vld [vmem:[#allocation2 + $0x50] sm:$0xff]
    %v1331 = vld [vmem:[#allocation2 + $0xa8] sm:$0xff]
    %v1332 = vld [vmem:[#allocation2 + $0x100] sm:$0xff]
    %v1333 = vld [vmem:[#allocation2 + $0x158] sm:$0xff]
    %v1334 = vld [vmem:[#allocation2 + $0x1b0] sm:$0xff]
    %v1335 = vld [vmem:[#allocation2 + $0x208] sm:$0xff]
    %v1336 = vld [vmem:[#allocation2 + $0x260] sm:$0xff]
    %v1337 = vld [vmem:[#allocation2 + $0x2b8] sm:$0xff]
    %v1339 = vsel %vm706, %v1328, 0
    %v1342 = vsel %vm706, %v1329, 0
    %1344 = vmatpush.msra.mxu0 0.0
    %1345 = vmatpush.msra.mxu0 0.0
    %1346 = vmatpush.msra.mxu0 0.0
    %1347 = vmatpush.msra.mxu0 0.0
    %1348 = vmatpush.msra.mxu0 0.0
    %1349 = vmatpush.msra.mxu0 0.0
    %1350 = vmatpush.msra.mxu0 0.0
    %1351 = vmatpush.msra.mxu0 0.0
    %1352 = vmatpush.msra.mxu0 %v1337
    %1353 = vmatpush.msra.mxu0 %v1336
    %1354 = vmatpush.msra.mxu0 %v1335
    %1355 = vmatpush.msra.mxu0 %v1334
    %1356 = vmatpush.msra.mxu0 %v1333
    %1357 = vmatpush.msra.mxu0 %v1332
    %1358 = vmatpush.msra.mxu0 %v1331
    %1359 = vmatpush.msra.mxu0 %v1330
    %1360 = vmatmul.f32.gmra.mxu0 %v1339
    %v1361 = vpop.f32.mrf.mxu0
    %v1362 = vadd.f32 0.0, %v1361
    %1363 = vmatmul.f32.gmra.mxu0 %v1342
    %v1364 = vpop.f32.mrf.mxu0
    %v1365 = vadd.f32 0.0, %v1364
    %1366 = vdwg.mxu0
    %v1367 = vadd.f32 %v1205, %v1362
    %v1368 = vadd.f32 %v1206, %v1365
    %v1369 = vld [vmem:[%s4 + $0xe] sm:$0x1]
    %v1370 = vperm.slane %v1369, 0
    %v1371 = vadd.f32 %v1367, %v1370
    %v1372 = vadd.f32 %v1368, %v1370
    %v1373 = vld [vmem:[%s4 + $0x1] sm:$0x1]
    %v1374 = vmul.f32 %v1371, %v1371
    %v1375 = vmul.f32 %v1372, %v1372
    %v1376 = vsel %vm103, %v1374, 0.0
    %1377 = vadd.xlane.f32.xlu0 %v1376
    %v1378 = vpop.xlane.xlu0 %1377
    %v1379 = vsel %vm103, %v1375, 0.0
    %1380 = vadd.xlane.f32.xlu0 %v1379
    %v1381 = vpop.xlane.xlu0 %1380
    %v1382 = vmul.f32 %v1378, %v116
    %v1383 = vmul.f32 %v1381, %v116
    %v1384 = vadd.f32 %v1382, 1.1920929e-07
    %v1385 = vadd.f32 %v1383, 1.1920929e-07
    %v1386 = vrsqrt.pop %v1384
    %v1387 = vmul.f32 %v1386, %v1384
    %v1388 = vmul.f32 %v1387, %v1386
    %v1389 = vmul.f32 0.5, %v1388
    %v1390 = vsub.f32 1.5, %v1389
    %v1391 = vmul.f32 %v1386, %v1390
    %vm1392 = vweird.f32 %v1384
    %vm1393 = vweird.f32 %v1386
    %vm1394 = vmor %vm1392, %vm1393
    %v1395 = vsel %vm1394, %v1386, %v1391
    %v1396 = vrsqrt.pop %v1385
    %v1397 = vmul.f32 %v1396, %v1385
    %v1398 = vmul.f32 %v1397, %v1396
    %v1399 = vmul.f32 0.5, %v1398
    %v1400 = vsub.f32 1.5, %v1399
    %v1401 = vmul.f32 %v1396, %v1400
    %vm1402 = vweird.f32 %v1385
    %vm1403 = vweird.f32 %v1396
    %vm1404 = vmor %vm1402, %vm1403
    %v1405 = vsel %vm1404, %v1396, %v1401
    %v1406 = vmul.f32 %v1371, %v1395
    %v1407 = vmul.f32 %v1372, %v1405
    %v1408 = vperm.slane %v1373, 0
    %v1409 = vmul.f32 %v1406, %v1408
    %v1410 = vmul.f32 %v1407, %v1408
    %v1411 = vld [vmem:[#allocation2 + $0x10] sm:$0xff]
    %v1412 = vld [vmem:[#allocation2 + $0x68] sm:$0xff]
    %v1413 = vld [vmem:[#allocation2 + $0xc0] sm:$0xff]
    %v1414 = vld [vmem:[#allocation2 + $0x118] sm:$0xff]
    %v1415 = vld [vmem:[%s4 + $0x2] sm:$0x1]
    %v1416 = vperm.slane %v1415, 0
    %v1418 = vsel %vm103, %v1409, 0
    %v1421 = vsel %vm103, %v1410, 0
    %1423 = vmatpush.msra.mxu0 0.0
    %1424 = vmatpush.msra.mxu0 0.0
    %1425 = vmatpush.msra.mxu0 0.0
    %1426 = vmatpush.msra.mxu0 0.0
    %1427 = vmatpush.msra.mxu0 0.0
    %1428 = vmatpush.msra.mxu0 0.0
    %1429 = vmatpush.msra.mxu0 0.0
    %1430 = vmatpush.msra.mxu0 0.0
    %1431 = vmatpush.msra.mxu0 0.0
    %1432 = vmatpush.msra.mxu0 0.0
    %1433 = vmatpush.msra.mxu0 0.0
    %1434 = vmatpush.msra.mxu0 0.0
    %1435 = vmatpush.msra.mxu0 %v1414
    %1436 = vmatpush.msra.mxu0 %v1413
    %1437 = vmatpush.msra.mxu0 %v1412
    %1438 = vmatpush.msra.mxu0 %v1411
    %1439 = vmatmul.f32.gmra.mxu0 %v1418
    %v1440 = vpop.f32.mrf.mxu0
    %v1441 = vadd.f32 %v1416, %v1440
    %1442 = vmatmul.f32.gmra.mxu0 %v1421
    %v1443 = vpop.f32.mrf.mxu0
    %v1444 = vadd.f32 %v1416, %v1443
    %1445 = vdwg.mxu0
    %1446 = vst [vmem:[%s5] sm:$0xff] %v1441
    %1447 = vst [vmem:[%s5 + $0x8] sm:$0xff] %v1444
    // Predicated region
    $region26: #{forward.1} parent=1 // pred_check
      _
    $region27: #{forward.1} parent=1 // pred_check_branch
      %1449 = sbr.rel (0) target = $region29
    $region28: #{forward.1} parent=1 // pred_region
      _
    $region29: #{forward.1} parent=1 // pred_fallthru
      _
    // Predicated region
    $region30: #{forward.1} parent=1 // pred_check
      _
    $region31: #{forward.1} parent=1 // pred_check_branch
      %1451 = sbr.rel (0) target = $region33
    $region32: #{forward.1} parent=1 // pred_region
      _
    $region33: #{forward.1} parent=1 // pred_fallthru
      _
    %1452 = vsyncpa [#allocation3], 1

</llo_original>
